<compile_context>
chip_gen: v6e
topology: v6e:2x2x1
jax: 0.10.0
libtpu: 0.0.40
codegen_flags: <defaults>
</compile_context>

<pallas_src>
import jax
import jax.numpy as jnp
from jax.experimental import pallas as pl
from jax.experimental.pallas import tpu as pltpu

_NEG_BIG = -1e30  # bias for padded class columns: exp(-1e30 - m) == 0


def _round_up(x, m):
    return (x + m - 1) // m * m


def _cdiv(a, b):
    return (a + b - 1) // b


def _mlp_logits(x_ref, w1_ref, b1_ref, w2_ref, b2_ref):
    # x:  (TB, D)  as stored in HBM (f32); cast to the MXU compute dtype here
    #     (a VPU op overlapped with the pipelined DMAs) instead of
    #     materializing a padded bf16 copy of x in HBM.
    # w1: (D, Hp)  compute dtype;  b1: (1, Hp) f32
    # w2: (Hp, Kp) compute dtype;  b2: (1, Kp) f32
    x = x_ref[...].astype(w1_ref.dtype)
    h = jnp.dot(x, w1_ref[...], preferred_element_type=jnp.float32)
    h = jnp.maximum(h + b1_ref[...], 0.0)                      # f32 epilogue
    logits = jnp.dot(h.astype(w2_ref.dtype), w2_ref[...],
                     preferred_element_type=jnp.float32) + b2_ref[...]
    return logits                                              # (TB, Kp) f32


def _logsumexp_rows(logits):
    m = jnp.max(logits, axis=1, keepdims=True)
    return m + jnp.log(jnp.sum(jnp.exp(logits - m), axis=1, keepdims=True))


def _jem_kernel_with_logits(x_ref, w1_ref, b1_ref, w2_ref, b2_ref,
                            lse_ref, logits_ref):
    logits = _mlp_logits(x_ref, w1_ref, b1_ref, w2_ref, b2_ref)
    logits_ref[...] = logits.astype(logits_ref.dtype)   # bf16, lane-dense
    lse_ref[...] = _logsumexp_rows(logits).astype(lse_ref.dtype)


def _jem_kernel_lse_only(x_ref, w1_ref, b1_ref, w2_ref, b2_ref, lse_ref):
    logits = _mlp_logits(x_ref, w1_ref, b1_ref, w2_ref, b2_ref)
    lse_ref[...] = _logsumexp_rows(logits).astype(lse_ref.dtype)


def _vmem_budget_bytes():
    """Usable VMEM budget for kernel buffers (with headroom), per generation."""
    try:
        cap = pltpu.get_tpu_info().vmem_capacity_bytes
    except Exception:
        cap = 64 * 1024 * 1024        # conservative fallback (v7x physical)
    # Keep ~25% headroom for Mosaic-internal scratch / compiler temporaries.
    return max(int(cap * 3 // 4), 32 * 1024 * 1024)


def jem_forward(x_nchw, w1, b1, w2, b2, return_logits=False, *,
                block_b=2048, compute_dtype=jnp.bfloat16):
    """JEM forward: logits = MLP(flatten(x)); return logsumexp(logits, axis=1).

    Matches torch: flatten NCHW row-major, Linear -> ReLU -> Linear, then
    logsumexp over the class axis.  Matmul operands use `compute_dtype`
    (bf16 by default) with f32 accumulation and f32 epilogue.
    """
    n = x_nchw.shape[0]
    x_flat = x_nchw.reshape(n, -1)     # layout-only, no extra HBM pass
    d = x_flat.shape[1]
    h_dim = w1.shape[1]
    k = w2.shape[1]

    # Pad only the tiny operands: hidden / class dims up to 128 lanes so the
    # matmuls are MXU-aligned and the logits store is lane-dense.  Zero pads
    # on hidden are inert (zero weight rows, ReLU(0)=0); padded class columns
    # get a -1e30 bias so they vanish under logsumexp.  x itself is NOT
    # padded: its feature block is full-extent (legal: last dim == array dim).
    hp = _round_up(h_dim, 128)
    kp = _round_up(k, 128)

    w1_p = jnp.pad(w1.astype(jnp.float32),
                   ((0, 0), (0, hp - h_dim))).astype(compute_dtype)
    b1_p = jnp.pad(jnp.asarray(b1, jnp.float32).reshape(1, -1),
                   ((0, 0), (0, hp - h_dim)))
    w2_p = jnp.pad(w2.astype(jnp.float32),
                   ((0, hp - h_dim), (0, kp - k))).astype(compute_dtype)
    b2_p = jnp.pad(jnp.asarray(b2, jnp.float32).reshape(1, -1),
                   ((0, 0), (0, kp - k)), constant_values=_NEG_BIG)

    x_bytes = jnp.dtype(x_flat.dtype).itemsize
    cdt = jnp.dtype(compute_dtype).itemsize

    # Batch tile: multiple of 128 sublanes, capped by block_b.  Ensure at
    # least two tiles for reasonably sized batches so both v7x TensorCores
    # get work under the "parallel" grid axis.
    tb = max(128, min(block_b, _round_up(n, 128)))
    if n > 256:
        tb = min(tb, _round_up(_cdiv(n, 2), 128))

    def vmem_need(tb_):
        need = 2 * tb_ * d * x_bytes                 # x tile, double-buffered
        need += 2 * (d * hp * cdt + hp * 4)          # w1 + b1 (default dbl-buf)
        need += 2 * (hp * kp * cdt + kp * 4)         # w2 + b2
        need += 2 * tb_ * 4                          # lse out
        if return_logits:
            need += 2 * tb_ * kp * cdt               # bf16 logits out
        need += tb_ * (hp + 2 * kp) * 4              # in-kernel f32 temporaries
        return need

    budget = _vmem_budget_bytes()
    while tb > 128 and vmem_need(tb) > budget:
        tb = max(128, _round_up(tb // 2, 128))
    # Note: for image-scale flattened D where even tb=128 would not fit, a
    # second "arbitrary" grid axis tiling the contraction dim with an f32
    # scratch accumulator would be the right extension (not needed here).

    grid = (_cdiv(n, tb),)
    in_specs = [
        pl.BlockSpec((tb, d), lambda i: (i, 0)),    # x: batch-tiled, full feat
        pl.BlockSpec((d, hp), lambda i: (0, 0)),    # w1: resident
        pl.BlockSpec((1, hp), lambda i: (0, 0)),    # b1: resident
        pl.BlockSpec((hp, kp), lambda i: (0, 0)),   # w2: resident
        pl.BlockSpec((1, kp), lambda i: (0, 0)),    # b2: resident
    ]

    # Accurate need + generous headroom; never below the true requirement and
    # (given the budget-driven tb shrink) always under the physical ceiling.
    vmem_limit = int(max(vmem_need(tb) + (8 << 20), 32 << 20))
    compiler_params = pltpu.CompilerParams(
        dimension_semantics=("parallel",),   # megacore-shard the batch axis
        vmem_limit_bytes=vmem_limit,
    )

    if return_logits:
        lse, logits_p = pl.pallas_call(
            _jem_kernel_with_logits,
            out_shape=(
                jax.ShapeDtypeStruct((n, 1), jnp.float32),
                jax.ShapeDtypeStruct((n, kp), compute_dtype),
            ),
            grid_spec=pltpu.PrefetchScalarGridSpec(
                num_scalar_prefetch=0,
                grid=grid,
                in_specs=in_specs,
                out_specs=[
                    pl.BlockSpec((tb, 1), lambda i: (i, 0)),
                    pl.BlockSpec((tb, kp), lambda i: (i, 0)),  # lane-dense
                ],
            ),
            compiler_params=compiler_params,
        )(x_flat, w1_p, b1_p, w2_p, b2_p)
        return lse[:, 0], logits_p[:, :k]

    lse = pl.pallas_call(
        _jem_kernel_lse_only,
        out_shape=jax.ShapeDtypeStruct((n, 1), jnp.float32),
        grid_spec=pltpu.PrefetchScalarGridSpec(
            num_scalar_prefetch=0,
            grid=grid,
            in_specs=in_specs,
            out_specs=pl.BlockSpec((tb, 1), lambda i: (i, 0)),
        ),
        compiler_params=compiler_params,
    )(x_flat, w1_p, b1_p, w2_p, b2_p)
    return lse[:, 0]


if __name__ == "__main__":
    # Small shapes consistent with the module: batch=2, channels=4, spatial=16.
    B, C, H, W = 2, 4, 16, 16
    HIDDEN = 32
    NUM_CLASSES = 10
    D = C * H * W

    key = jax.random.PRNGKey(0)
    kx, k1, k2, k3, k4 = jax.random.split(key, 5)

    x = jax.random.normal(kx, (B, C, H, W), dtype=jnp.float32)

    # Deterministic parameter initialization for the synthetic logp_net MLP.
    w1 = jax.random.normal(k1, (D, HIDDEN), dtype=jnp.float32) * 0.05
    b1 = jax.random.normal(k2, (1, HIDDEN), dtype=jnp.float32) * 0.01
    w2 = jax.random.normal(k3, (HIDDEN, NUM_CLASSES), dtype=jnp.float32) * 0.05
    b2 = jax.random.normal(k4, (1, NUM_CLASSES), dtype=jnp.float32) * 0.01

    # Kernel: both variants (with and without logits writeback).
    lse, logits = jem_forward(x, w1, b1, w2, b2, return_logits=True)
    lse_only = jem_forward(x, w1, b1, w2, b2, return_logits=False)
    jax.block_until_ready((lse, logits, lse_only))

    # Reference in plain JAX, with the same bf16 operand rounding / f32
    # accumulation so the comparison is apples-to-apples.
    def bf16(a):
        return a.astype(jnp.bfloat16).astype(jnp.float32)

    x_flat = x.reshape(B, -1)
    h_ref = jnp.maximum(bf16(x_flat) @ bf16(w1) + b1, 0.0)
    logits_ref = bf16(h_ref) @ bf16(w2) + b2
    lse_ref = jax.scipy.special.logsumexp(logits_ref, axis=1)

    assert lse.shape == (B,)
    assert lse_only.shape == (B,)
    assert logits.shape == (B, NUM_CLASSES)
    # Kernel logits are stored in bf16 (bandwidth), so use a slightly looser
    # tolerance there; lse itself is computed from f32 logits in-kernel.
    assert jnp.allclose(logits.astype(jnp.float32), logits_ref,
                        atol=2e-2, rtol=2e-2)
    assert jnp.allclose(lse, lse_ref, atol=1e-2, rtol=1e-2)
    assert jnp.allclose(lse_only, lse, atol=1e-6, rtol=1e-6)

    print("KERNEL_OK")
</pallas_src>

<mosaic_0001>
module attributes {stable_mosaic.version = 11 : i64} {
  func.func @_jem_kernel_with_logits(%arg0: i32, %arg1: memref<128x1024xf32, #tpu.memory_space<vmem>>, %arg2: memref<1024x128xbf16, #tpu.memory_space<vmem>>, %arg3: memref<1x128xf32, #tpu.memory_space<vmem>>, %arg4: memref<128x128xbf16, #tpu.memory_space<vmem>>, %arg5: memref<1x128xf32, #tpu.memory_space<vmem>>, %arg6: memref<128x1xf32, #tpu.memory_space<vmem>>, %arg7: memref<128x128xbf16, #tpu.memory_space<vmem>>) attributes {dimension_semantics = [#tpu.dimension_semantics<parallel>], iteration_bounds = array<i64: 1>, scalar_prefetch = 0 : i64, scratch_operands = 0 : i64, tpu.core_type = #tpu.core_type<tc>, window_params = [{transform_indices = @transform_0, window_bounds = array<i64: 128, 1024>}, {pipeline_mode = #tpu.pipeline_mode<synchronous>, transform_indices = @transform_1, window_bounds = array<i64: 1024, 128>}, {pipeline_mode = #tpu.pipeline_mode<synchronous>, transform_indices = @transform_2, window_bounds = array<i64: 1, 128>}, {pipeline_mode = #tpu.pipeline_mode<synchronous>, transform_indices = @transform_3, window_bounds = array<i64: 128, 128>}, {pipeline_mode = #tpu.pipeline_mode<synchronous>, transform_indices = @transform_4, window_bounds = array<i64: 1, 128>}, {transform_indices = @transform_5, window_bounds = array<i64: 128, 1>}, {transform_indices = @transform_6, window_bounds = array<i64: 128, 128>}]} {
    %c0 = arith.constant 0 : index
    %c0_0 = arith.constant 0 : index
    %0 = vector.load %arg1[%c0, %c0_0] : memref<128x1024xf32, #tpu.memory_space<vmem>>, vector<128x1024xf32>
    %1 = arith.truncf %0 : vector<128x1024xf32> to vector<128x1024xbf16>
    %c0_1 = arith.constant 0 : index
    %c0_2 = arith.constant 0 : index
    %2 = vector.load %arg2[%c0_1, %c0_2] : memref<1024x128xbf16, #tpu.memory_space<vmem>>, vector<1024x128xbf16>
    %cst = arith.constant dense<0.000000e+00> : vector<128x128xf32>
    %3 = tpu.matmul %1, %2, %cst {dimension_numbers = #tpu.dot_dimension_numbers<[1], [0], [0], [1], [0, 0, 1, 1], [], []>} : vector<128x1024xbf16>, vector<1024x128xbf16>, vector<128x128xf32> -> vector<128x128xf32>
    %c0_3 = arith.constant 0 : index
    %c0_4 = arith.constant 0 : index
    %4 = vector.load %arg3[%c0_3, %c0_4] : memref<1x128xf32, #tpu.memory_space<vmem>>, vector<1x128xf32>
    %5 = vector.broadcast %4 : vector<1x128xf32> to vector<128x128xf32>
    %6 = arith.addf %3, %5 : vector<128x128xf32>
    %cst_5 = arith.constant 0.000000e+00 : f32
    %7 = vector.broadcast %cst_5 : f32 to vector<128x128xf32>
    %8 = arith.maximumf %6, %7 : vector<128x128xf32>
    %9 = arith.truncf %8 : vector<128x128xf32> to vector<128x128xbf16>
    %c0_6 = arith.constant 0 : index
    %c0_7 = arith.constant 0 : index
    %10 = vector.load %arg4[%c0_6, %c0_7] : memref<128x128xbf16, #tpu.memory_space<vmem>>, vector<128x128xbf16>
    %cst_8 = arith.constant dense<0.000000e+00> : vector<128x128xf32>
    %11 = tpu.matmul %9, %10, %cst_8 {dimension_numbers = #tpu.dot_dimension_numbers<[1], [0], [0], [1], [0, 0, 1, 1], [], []>} : vector<128x128xbf16>, vector<128x128xbf16>, vector<128x128xf32> -> vector<128x128xf32>
    %c0_9 = arith.constant 0 : index
    %c0_10 = arith.constant 0 : index
    %12 = vector.load %arg5[%c0_9, %c0_10] : memref<1x128xf32, #tpu.memory_space<vmem>>, vector<1x128xf32>
    %13 = vector.broadcast %12 : vector<1x128xf32> to vector<128x128xf32>
    %14 = arith.addf %11, %13 : vector<128x128xf32>
    %15 = arith.truncf %14 : vector<128x128xf32> to vector<128x128xbf16>
    %c0_11 = arith.constant 0 : index
    %c0_12 = arith.constant 0 : index
    %16 = vector.load %arg7[%c0_11, %c0_12] : memref<128x128xbf16, #tpu.memory_space<vmem>>, vector<128x128xbf16>
    tpu.vector_store %arg7[%c0_11, %c0_12], %15 {strides = array<i32>} : memref<128x128xbf16, #tpu.memory_space<vmem>>, vector<128x128xbf16>,
    %cst_13 = arith.constant dense<0xFF800000> : vector<128xf32>
    %17 = vector.multi_reduction <maximumf>, %14, %cst_13 [1] : vector<128x128xf32> to vector<128xf32>
    %18 = vector.shape_cast %17 : vector<128xf32> to vector<128x1xf32>
    %19 = vector.broadcast %18 : vector<128x1xf32> to vector<128x128xf32>
    %20 = arith.subf %14, %19 : vector<128x128xf32>
    %21 = math.exp %20 : vector<128x128xf32>
    %cst_14 = arith.constant dense<0.000000e+00> : vector<128xf32>
    %22 = vector.multi_reduction <add>, %21, %cst_14 [1] : vector<128x128xf32> to vector<128xf32>
    %23 = vector.shape_cast %22 : vector<128xf32> to vector<128x1xf32>
    %24 = math.log %23 : vector<128x1xf32>
    %25 = arith.addf %18, %24 : vector<128x1xf32>
    %c0_15 = arith.constant 0 : index
    %c0_16 = arith.constant 0 : index
    %26 = vector.load %arg6[%c0_15, %c0_16] : memref<128x1xf32, #tpu.memory_space<vmem>>, vector<128x1xf32>
    tpu.vector_store %arg6[%c0_15, %c0_16], %25 {strides = array<i32>} : memref<128x1xf32, #tpu.memory_space<vmem>>, vector<128x1xf32>,
    return
  }
  func.func @transform_0(%arg0: i32) -> (i32, i32) {
    %c0_i32 = arith.constant 0 : i32
    %c0_i32_0 = arith.constant 0 : i32
    return %arg0, %c0_i32 : i32, i32
  }
  func.func @transform_1(%arg0: i32) -> (i32, i32) {
    %c0_i32 = arith.constant 0 : i32
    %c0_i32_0 = arith.constant 0 : i32
    %c0_i32_1 = arith.constant 0 : i32
    return %c0_i32, %c0_i32_0 : i32, i32
  }
  func.func @transform_2(%arg0: i32) -> (i32, i32) {
    %c0_i32 = arith.constant 0 : i32
    %c0_i32_0 = arith.constant 0 : i32
    %c0_i32_1 = arith.constant 0 : i32
    return %c0_i32, %c0_i32_0 : i32, i32
  }
  func.func @transform_3(%arg0: i32) -> (i32, i32) {
    %c0_i32 = arith.constant 0 : i32
    %c0_i32_0 = arith.constant 0 : i32
    %c0_i32_1 = arith.constant 0 : i32
    return %c0_i32, %c0_i32_0 : i32, i32
  }
  func.func @transform_4(%arg0: i32) -> (i32, i32) {
    %c0_i32 = arith.constant 0 : i32
    %c0_i32_0 = arith.constant 0 : i32
    %c0_i32_1 = arith.constant 0 : i32
    return %c0_i32, %c0_i32_0 : i32, i32
  }
  func.func @transform_5(%arg0: i32) -> (i32, i32) {
    %c0_i32 = arith.constant 0 : i32
    %c0_i32_0 = arith.constant 0 : i32
    return %arg0, %c0_i32 : i32, i32
  }
  func.func @transform_6(%arg0: i32) -> (i32, i32) {
    %c0_i32 = arith.constant 0 : i32
    %c0_i32_0 = arith.constant 0 : i32
    return %arg0, %c0_i32 : i32, i32
  }
}

</mosaic_0001>

<llo_original>
// kernel: tpu_custom_call.1
$region0: #{tpu_custom_call.1}
  #allocation0 [shape = 'u32[]', space=smem, size = 0x4, offset = 0x4, fixed_abs, tag = 'smem constant byte address 0x4 - core index']
  #allocation1 [shape = 'u32[144,128]{1,0:T(1,128)}', space=vmem, size = 0x12000, scoped, tag = 'internal scratch']
  %s0 = inlined_call_operand.hbm [shape: f32[2,1024], index: 0, kind: input, shape index: {}]
  %s1 = inlined_call_operand.hbm [shape: bf16[1024,128], index: 1, kind: input, shape index: {}]
  %s2 = inlined_call_operand.vmem [shape: f32[1,128], index: 2, kind: input, shape index: {}]
  %s3 = inlined_call_operand.hbm [shape: bf16[128,128], index: 3, kind: input, shape index: {}]
  %s4 = inlined_call_operand.vmem [shape: f32[1,128], index: 4, kind: input, shape index: {}]
  %s5 = inlined_call_operand.vmem [shape: f32[2,1], index: 5, kind: output, shape index: {0}]
  %s6 = inlined_call_operand.hbm [shape: bf16[2,128], index: 6, kind: output, shape index: {1}]
  %7 = xla_tuple %s5, %s6
  %s8 = sld [smem:[#allocation0]]
  $region80: #{tpu_custom_call.1} parent=0
    _
  %s10 = ssub.s32 1, %s8
  %s11 = scalar_select 0, %s10, %s8
  $region1: #{tpu_custom_call.1} parent=0
    #allocation2 [shape = 'u8[524288]{0}', space=vmem, size = 0x80000, scoped, tag = 'input window, operand 0, single buffered']
    #allocation3 [shape = 's32[1]{0}', space=sflag, size = 0x4, scoped, tag = 'scoped memory for tpu_custom_call.1']
    #allocation4 [shape = 's32[1]{0}', space=sflag, size = 0x4, scoped, tag = 'scoped memory for tpu_custom_call.1']
    #allocation5 [shape = 'u8[262144]{0}', space=vmem, size = 0x40000, scoped, tag = 'input window, operand 1, single buffered']
    #allocation6 [shape = 's32[1]{0}', space=sflag, size = 0x4, scoped, tag = 'scoped memory for tpu_custom_call.1']
    #allocation7 [shape = 'u8[32768]{0}', space=vmem, size = 0x8000, scoped, tag = 'input window, operand 3, single buffered']
    #allocation8 [shape = 'u8[65536]{0}', space=vmem, size = 0x10000, scoped, tag = 'output window, operand 0, single buffered']
    #allocation9 [shape = 'u8[32768]{0}', space=vmem, size = 0x8000, scoped, tag = 'output window, operand 1, single buffered']
    %12 = vsyncpa [#allocation3], 0
    %13 = vsyncpa [#allocation6], 0
    %14 = vsyncpa [#allocation4], 0
    // Predicated region
    $region2: #{tpu_custom_call.1} parent=1 // pred_check
      _
    $region3: #{tpu_custom_call.1} parent=1 // pred_check_branch
      %16 = sbr.rel (0) target = $region5
    $region4: #{tpu_custom_call.1} parent=1 // pred_region
      %s18 = ssub.s32 16384, 256
      %19 = vsyncadd [#allocation3], %s18
      %s20 = sshll.u32 [#allocation2], 4
      %s21 = int_to_ptr.vmem [resolvable:$true] %s20
      %26 = dma.hbm_to_vmem [thread:$0]  %s0, 256, %s21, [#allocation3], 256, 256, 16
    $region5: #{tpu_custom_call.1} parent=1 // pred_fallthru
      _
    // Predicated region
    $region6: #{tpu_custom_call.1} parent=1 // pred_check
      _
    $region7: #{tpu_custom_call.1} parent=1 // pred_check_branch
      %28 = sbr.rel (0) target = $region9
    $region8: #{tpu_custom_call.1} parent=1 // pred_region
      %s30 = ssub.s32 8192, 8192
      %31 = vsyncadd [#allocation6], %s30
      %s32 = sshll.u32 [#allocation5], 4
      %s33 = int_to_ptr.vmem [resolvable:$true] %s32
      %38 = dma.hbm_to_vmem [thread:$0]  %s1, 8192, %s33, [#allocation6], 64, 64, 4
    $region9: #{tpu_custom_call.1} parent=1 // pred_fallthru
      _
    // Predicated region
    $region10: #{tpu_custom_call.1} parent=1 // pred_check
      _
    $region11: #{tpu_custom_call.1} parent=1 // pred_check_branch
      %40 = sbr.rel (0) target = $region13
    $region12: #{tpu_custom_call.1} parent=1 // pred_region
      _
    $region13: #{tpu_custom_call.1} parent=1 // pred_fallthru
      _
    // Predicated region
    $region14: #{tpu_custom_call.1} parent=1 // pred_check
      _
    $region15: #{tpu_custom_call.1} parent=1 // pred_check_branch
      %42 = sbr.rel (0) target = $region17
    $region16: #{tpu_custom_call.1} parent=1 // pred_region
      %s44 = ssub.s32 1024, 1024
      %45 = vsyncadd [#allocation6], %s44
      %s46 = sshll.u32 [#allocation7], 4
      %s47 = int_to_ptr.vmem [resolvable:$true] %s46
      %52 = dma.hbm_to_vmem [thread:$0]  %s3, 1024, %s47, [#allocation6], 64, 64, 4
    $region17: #{tpu_custom_call.1} parent=1 // pred_fallthru
      _
    // Predicated region
    $region18: #{tpu_custom_call.1} parent=1 // pred_check
      _
    $region19: #{tpu_custom_call.1} parent=1 // pred_check_branch
      %54 = sbr.rel (0) target = $region21
    $region20: #{tpu_custom_call.1} parent=1 // pred_region
      _
    $region21: #{tpu_custom_call.1} parent=1 // pred_fallthru
      _
    // Predicated region
    $region22: #{tpu_custom_call.1} parent=1 // pred_check
      _
    $region23: #{tpu_custom_call.1} parent=1 // pred_check_branch
      %56 = sbr.rel (0) target = $region25
    $region24: #{tpu_custom_call.1} parent=1 // pred_region
      %57 = dma.done [#allocation3], 16384
    $region25: #{tpu_custom_call.1} parent=1 // pred_fallthru
      _
    // Predicated region
    $region26: #{tpu_custom_call.1} parent=1 // pred_check
      _
    $region27: #{tpu_custom_call.1} parent=1 // pred_check_branch
      %59 = sbr.rel (0) target = $region29
    $region28: #{tpu_custom_call.1} parent=1 // pred_region
      %60 = dma.done [#allocation6], 8192
    $region29: #{tpu_custom_call.1} parent=1 // pred_fallthru
      _
    // Predicated region
    $region30: #{tpu_custom_call.1} parent=1 // pred_check
      _
    $region31: #{tpu_custom_call.1} parent=1 // pred_check_branch
      %62 = sbr.rel (0) target = $region33
    $region32: #{tpu_custom_call.1} parent=1 // pred_region
      %63 = dma.done [#allocation6], 1024
    $region33: #{tpu_custom_call.1} parent=1 // pred_fallthru
      _
    %v65 = vld [vmem:[#allocation2] sm:$0xff]
    %v66 = vld [vmem:[#allocation2 + $0x8] sm:$0xff]
    %v67 = vld [vmem:[#allocation2 + $0x10] sm:$0xff]
    %v68 = vld [vmem:[#allocation2 + $0x18] sm:$0xff]
    %v69 = vld [vmem:[#allocation2 + $0x20] sm:$0xff]
    %v70 = vld [vmem:[#allocation2 + $0x28] sm:$0xff]
    %v71 = vld [vmem:[#allocation2 + $0x30] sm:$0xff]
    %v72 = vld [vmem:[#allocation2 + $0x38] sm:$0xff]
    %v73 = vld [vmem:[#allocation2 + $0x40] sm:$0xff]
    %v74 = vld [vmem:[#allocation2 + $0x48] sm:$0xff]
    %v75 = vld [vmem:[#allocation2 + $0x50] sm:$0xff]
    %v76 = vld [vmem:[#allocation2 + $0x58] sm:$0xff]
    %v77 = vld [vmem:[#allocation2 + $0x60] sm:$0xff]
    %v78 = vld [vmem:[#allocation2 + $0x68] sm:$0xff]
    %v79 = vld [vmem:[#allocation2 + $0x70] sm:$0xff]
    %v80 = vld [vmem:[#allocation2 + $0x78] sm:$0xff]
    %v81 = vld [vmem:[#allocation2 + $0x80] sm:$0xff]
    %v82 = vld [vmem:[#allocation2 + $0x88] sm:$0xff]
    %v83 = vld [vmem:[#allocation2 + $0x90] sm:$0xff]
    %v84 = vld [vmem:[#allocation2 + $0x98] sm:$0xff]
    %v85 = vld [vmem:[#allocation2 + $0xa0] sm:$0xff]
    %v86 = vld [vmem:[#allocation2 + $0xa8] sm:$0xff]
    %v87 = vld [vmem:[#allocation2 + $0xb0] sm:$0xff]
    %v88 = vld [vmem:[#allocation2 + $0xb8] sm:$0xff]
    %v89 = vld [vmem:[#allocation2 + $0xc0] sm:$0xff]
    %v90 = vld [vmem:[#allocation2 + $0xc8] sm:$0xff]
    %v91 = vld [vmem:[#allocation2 + $0xd0] sm:$0xff]
    %v92 = vld [vmem:[#allocation2 + $0xd8] sm:$0xff]
    %v93 = vld [vmem:[#allocation2 + $0xe0] sm:$0xff]
    %v94 = vld [vmem:[#allocation2 + $0xe8] sm:$0xff]
    %v95 = vld [vmem:[#allocation2 + $0xf0] sm:$0xff]
    %v96 = vld [vmem:[#allocation2 + $0xf8] sm:$0xff]
    %v97 = vld [vmem:[#allocation2 + $0x100] sm:$0xff]
    %v98 = vld [vmem:[#allocation2 + $0x108] sm:$0xff]
    %v99 = vld [vmem:[#allocation2 + $0x110] sm:$0xff]
    %v100 = vld [vmem:[#allocation2 + $0x118] sm:$0xff]
    %v101 = vld [vmem:[#allocation2 + $0x120] sm:$0xff]
    %v102 = vld [vmem:[#allocation2 + $0x128] sm:$0xff]
    %v103 = vld [vmem:[#allocation2 + $0x130] sm:$0xff]
    %v104 = vld [vmem:[#allocation2 + $0x138] sm:$0xff]
    %v105 = vld [vmem:[#allocation2 + $0x140] sm:$0xff]
    %v106 = vld [vmem:[#allocation2 + $0x148] sm:$0xff]
    %v107 = vld [vmem:[#allocation2 + $0x150] sm:$0xff]
    %v108 = vld [vmem:[#allocation2 + $0x158] sm:$0xff]
    %v109 = vld [vmem:[#allocation2 + $0x160] sm:$0xff]
    %v110 = vld [vmem:[#allocation2 + $0x168] sm:$0xff]
    %v111 = vld [vmem:[#allocation2 + $0x170] sm:$0xff]
    %v112 = vld [vmem:[#allocation2 + $0x178] sm:$0xff]
    %v113 = vld [vmem:[#allocation2 + $0x180] sm:$0xff]
    %v114 = vld [vmem:[#allocation2 + $0x188] sm:$0xff]
    %v115 = vld [vmem:[#allocation2 + $0x190] sm:$0xff]
    %v116 = vld [vmem:[#allocation2 + $0x198] sm:$0xff]
    %v117 = vld [vmem:[#allocation2 + $0x1a0] sm:$0xff]
    %v118 = vld [vmem:[#allocation2 + $0x1a8] sm:$0xff]
    %v119 = vld [vmem:[#allocation2 + $0x1b0] sm:$0xff]
    %v120 = vld [vmem:[#allocation2 + $0x1b8] sm:$0xff]
    %v121 = vld [vmem:[#allocation2 + $0x1c0] sm:$0xff]
    %v122 = vld [vmem:[#allocation2 + $0x1c8] sm:$0xff]
    %v123 = vld [vmem:[#allocation2 + $0x1d0] sm:$0xff]
    %v124 = vld [vmem:[#allocation2 + $0x1d8] sm:$0xff]
    %v125 = vld [vmem:[#allocation2 + $0x1e0] sm:$0xff]
    %v126 = vld [vmem:[#allocation2 + $0x1e8] sm:$0xff]
    %v127 = vld [vmem:[#allocation2 + $0x1f0] sm:$0xff]
    %v128 = vld [vmem:[#allocation2 + $0x1f8] sm:$0xff]
    %v129 = vld [vmem:[#allocation2 + $0x200] sm:$0xff]
    %v130 = vld [vmem:[#allocation2 + $0x208] sm:$0xff]
    %v131 = vld [vmem:[#allocation2 + $0x210] sm:$0xff]
    %v132 = vld [vmem:[#allocation2 + $0x218] sm:$0xff]
    %v133 = vld [vmem:[#allocation2 + $0x220] sm:$0xff]
    %v134 = vld [vmem:[#allocation2 + $0x228] sm:$0xff]
    %v135 = vld [vmem:[#allocation2 + $0x230] sm:$0xff]
    %v136 = vld [vmem:[#allocation2 + $0x238] sm:$0xff]
    %v137 = vld [vmem:[#allocation2 + $0x240] sm:$0xff]
    %v138 = vld [vmem:[#allocation2 + $0x248] sm:$0xff]
    %v139 = vld [vmem:[#allocation2 + $0x250] sm:$0xff]
    %v140 = vld [vmem:[#allocation2 + $0x258] sm:$0xff]
    %v141 = vld [vmem:[#allocation2 + $0x260] sm:$0xff]
    %v142 = vld [vmem:[#allocation2 + $0x268] sm:$0xff]
    %v143 = vld [vmem:[#allocation2 + $0x270] sm:$0xff]
    %v144 = vld [vmem:[#allocation2 + $0x278] sm:$0xff]
    %v145 = vld [vmem:[#allocation2 + $0x280] sm:$0xff]
    %v146 = vld [vmem:[#allocation2 + $0x288] sm:$0xff]
    %v147 = vld [vmem:[#allocation2 + $0x290] sm:$0xff]
    %v148 = vld [vmem:[#allocation2 + $0x298] sm:$0xff]
    %v149 = vld [vmem:[#allocation2 + $0x2a0] sm:$0xff]
    %v150 = vld [vmem:[#allocation2 + $0x2a8] sm:$0xff]
    %v151 = vld [vmem:[#allocation2 + $0x2b0] sm:$0xff]
    %v152 = vld [vmem:[#allocation2 + $0x2b8] sm:$0xff]
    %v153 = vld [vmem:[#allocation2 + $0x2c0] sm:$0xff]
    %v154 = vld [vmem:[#allocation2 + $0x2c8] sm:$0xff]
    %v155 = vld [vmem:[#allocation2 + $0x2d0] sm:$0xff]
    %v156 = vld [vmem:[#allocation2 + $0x2d8] sm:$0xff]
    %v157 = vld [vmem:[#allocation2 + $0x2e0] sm:$0xff]
    %v158 = vld [vmem:[#allocation2 + $0x2e8] sm:$0xff]
    %v159 = vld [vmem:[#allocation2 + $0x2f0] sm:$0xff]
    %v160 = vld [vmem:[#allocation2 + $0x2f8] sm:$0xff]
    %v161 = vld [vmem:[#allocation2 + $0x300] sm:$0xff]
    %v162 = vld [vmem:[#allocation2 + $0x308] sm:$0xff]
    %v163 = vld [vmem:[#allocation2 + $0x310] sm:$0xff]
    %v164 = vld [vmem:[#allocation2 + $0x318] sm:$0xff]
    %v165 = vld [vmem:[#allocation2 + $0x320] sm:$0xff]
    %v166 = vld [vmem:[#allocation2 + $0x328] sm:$0xff]
    %v167 = vld [vmem:[#allocation2 + $0x330] sm:$0xff]
    %v168 = vld [vmem:[#allocation2 + $0x338] sm:$0xff]
    %v169 = vld [vmem:[#allocation2 + $0x340] sm:$0xff]
    %v170 = vld [vmem:[#allocation2 + $0x348] sm:$0xff]
    %v171 = vld [vmem:[#allocation2 + $0x350] sm:$0xff]
    %v172 = vld [vmem:[#allocation2 + $0x358] sm:$0xff]
    %v173 = vld [vmem:[#allocation2 + $0x360] sm:$0xff]
    %v174 = vld [vmem:[#allocation2 + $0x368] sm:$0xff]
    %v175 = vld [vmem:[#allocation2 + $0x370] sm:$0xff]
    %v176 = vld [vmem:[#allocation2 + $0x378] sm:$0xff]
    %v177 = vld [vmem:[#allocation2 + $0x380] sm:$0xff]
    %v178 = vld [vmem:[#allocation2 + $0x388] sm:$0xff]
    %v179 = vld [vmem:[#allocation2 + $0x390] sm:$0xff]
    %v180 = vld [vmem:[#allocation2 + $0x398] sm:$0xff]
    %v181 = vld [vmem:[#allocation2 + $0x3a0] sm:$0xff]
    %v182 = vld [vmem:[#allocation2 + $0x3a8] sm:$0xff]
    %v183 = vld [vmem:[#allocation2 + $0x3b0] sm:$0xff]
    %v184 = vld [vmem:[#allocation2 + $0x3b8] sm:$0xff]
    %v185 = vld [vmem:[#allocation2 + $0x3c0] sm:$0xff]
    %v186 = vld [vmem:[#allocation2 + $0x3c8] sm:$0xff]
    %v187 = vld [vmem:[#allocation2 + $0x3d0] sm:$0xff]
    %v188 = vld [vmem:[#allocation2 + $0x3d8] sm:$0xff]
    %v189 = vld [vmem:[#allocation2 + $0x3e0] sm:$0xff]
    %v190 = vld [vmem:[#allocation2 + $0x3e8] sm:$0xff]
    %v191 = vld [vmem:[#allocation2 + $0x3f0] sm:$0xff]
    %v192 = vld [vmem:[#allocation2 + $0x3f8] sm:$0xff]
    %v321 = vcombine.low %v65, %v67
    %v322 = vcombine.high %v65, %v67
    %v323 = vcombine.low %v69, %v71
    %v324 = vcombine.high %v69, %v71
    %v326 = vunpack.c.l.s4 1983009808
    %v327 = vunpack.c.0.s8 %v326
    %v328 = vlaneseq
    %v329 = vshrl.u32 %v328, 7
    %v330 = vsub.s32 %v327, %v329
    %v331 = vrot.slane %v321, %v330
    %v333 = vunpack.c.l.s4 1983009808
    %v334 = vunpack.c.0.s8 %v333
    %v335 = vlaneseq
    %v336 = vshrl.u32 %v335, 7
    %v337 = vsub.s32 %v334, %v336
    %v338 = vrot.slane %v322, %v337
    %v340 = vunpack.c.l.s4 1983009808
    %v341 = vunpack.c.0.s8 %v340
    %v342 = vlaneseq
    %v343 = vshrl.u32 %v342, 7
    %v344 = vsub.s32 %v341, %v343
    %v345 = vrot.slane %v323, %v344
    %v347 = vunpack.c.l.s4 1983009808
    %v348 = vunpack.c.0.s8 %v347
    %v349 = vlaneseq
    %v350 = vshrl.u32 %v349, 7
    %v351 = vsub.s32 %v348, %v350
    %v352 = vrot.slane %v324, %v351
    %v353 = vcombine.low %v331, %v345
    %v354 = vcombine.high %v331, %v345
    %v355 = vcombine.low %v338, %v352
    %v356 = vcombine.high %v338, %v352
    %v357 = vcombine.low %v66, %v68
    %v358 = vcombine.high %v66, %v68
    %v359 = vcombine.low %v70, %v72
    %v360 = vcombine.high %v70, %v72
    %v362 = vunpack.c.l.s4 1983009808
    %v363 = vunpack.c.0.s8 %v362
    %v364 = vlaneseq
    %v365 = vshrl.u32 %v364, 7
    %v366 = vsub.s32 %v363, %v365
    %v367 = vrot.slane %v357, %v366
    %v369 = vunpack.c.l.s4 1983009808
    %v370 = vunpack.c.0.s8 %v369
    %v371 = vlaneseq
    %v372 = vshrl.u32 %v371, 7
    %v373 = vsub.s32 %v370, %v372
    %v374 = vrot.slane %v358, %v373
    %v376 = vunpack.c.l.s4 1983009808
    %v377 = vunpack.c.0.s8 %v376
    %v378 = vlaneseq
    %v379 = vshrl.u32 %v378, 7
    %v380 = vsub.s32 %v377, %v379
    %v381 = vrot.slane %v359, %v380
    %v383 = vunpack.c.l.s4 1983009808
    %v384 = vunpack.c.0.s8 %v383
    %v385 = vlaneseq
    %v386 = vshrl.u32 %v385, 7
    %v387 = vsub.s32 %v384, %v386
    %v388 = vrot.slane %v360, %v387
    %v389 = vcombine.low %v367, %v381
    %v390 = vcombine.high %v367, %v381
    %v391 = vcombine.low %v374, %v388
    %v392 = vcombine.high %v374, %v388
    %v393 = vcombine.low %v73, %v75
    %v394 = vcombine.high %v73, %v75
    %v395 = vcombine.low %v77, %v79
    %v396 = vcombine.high %v77, %v79
    %v398 = vunpack.c.l.s4 1983009808
    %v399 = vunpack.c.0.s8 %v398
    %v400 = vlaneseq
    %v401 = vshrl.u32 %v400, 7
    %v402 = vsub.s32 %v399, %v401
    %v403 = vrot.slane %v393, %v402
    %v405 = vunpack.c.l.s4 1983009808
    %v406 = vunpack.c.0.s8 %v405
    %v407 = vlaneseq
    %v408 = vshrl.u32 %v407, 7
    %v409 = vsub.s32 %v406, %v408
    %v410 = vrot.slane %v394, %v409
    %v412 = vunpack.c.l.s4 1983009808
    %v413 = vunpack.c.0.s8 %v412
    %v414 = vlaneseq
    %v415 = vshrl.u32 %v414, 7
    %v416 = vsub.s32 %v413, %v415
    %v417 = vrot.slane %v395, %v416
    %v419 = vunpack.c.l.s4 1983009808
    %v420 = vunpack.c.0.s8 %v419
    %v421 = vlaneseq
    %v422 = vshrl.u32 %v421, 7
    %v423 = vsub.s32 %v420, %v422
    %v424 = vrot.slane %v396, %v423
    %v425 = vcombine.low %v403, %v417
    %v426 = vcombine.high %v403, %v417
    %v427 = vcombine.low %v410, %v424
    %v428 = vcombine.high %v410, %v424
    %v429 = vcombine.low %v74, %v76
    %v430 = vcombine.high %v74, %v76
    %v431 = vcombine.low %v78, %v80
    %v432 = vcombine.high %v78, %v80
    %v434 = vunpack.c.l.s4 1983009808
    %v435 = vunpack.c.0.s8 %v434
    %v436 = vlaneseq
    %v437 = vshrl.u32 %v436, 7
    %v438 = vsub.s32 %v435, %v437
    %v439 = vrot.slane %v429, %v438
    %v441 = vunpack.c.l.s4 1983009808
    %v442 = vunpack.c.0.s8 %v441
    %v443 = vlaneseq
    %v444 = vshrl.u32 %v443, 7
    %v445 = vsub.s32 %v442, %v444
    %v446 = vrot.slane %v430, %v445
    %v448 = vunpack.c.l.s4 1983009808
    %v449 = vunpack.c.0.s8 %v448
    %v450 = vlaneseq
    %v451 = vshrl.u32 %v450, 7
    %v452 = vsub.s32 %v449, %v451
    %v453 = vrot.slane %v431, %v452
    %v455 = vunpack.c.l.s4 1983009808
    %v456 = vunpack.c.0.s8 %v455
    %v457 = vlaneseq
    %v458 = vshrl.u32 %v457, 7
    %v459 = vsub.s32 %v456, %v458
    %v460 = vrot.slane %v432, %v459
    %v461 = vcombine.low %v439, %v453
    %v462 = vcombine.high %v439, %v453
    %v463 = vcombine.low %v446, %v460
    %v464 = vcombine.high %v446, %v460
    %v465 = vcombine.low %v81, %v83
    %v466 = vcombine.high %v81, %v83
    %v467 = vcombine.low %v85, %v87
    %v468 = vcombine.high %v85, %v87
    %v470 = vunpack.c.l.s4 1983009808
    %v471 = vunpack.c.0.s8 %v470
    %v472 = vlaneseq
    %v473 = vshrl.u32 %v472, 7
    %v474 = vsub.s32 %v471, %v473
    %v475 = vrot.slane %v465, %v474
    %v477 = vunpack.c.l.s4 1983009808
    %v478 = vunpack.c.0.s8 %v477
    %v479 = vlaneseq
    %v480 = vshrl.u32 %v479, 7
    %v481 = vsub.s32 %v478, %v480
    %v482 = vrot.slane %v466, %v481
    %v484 = vunpack.c.l.s4 1983009808
    %v485 = vunpack.c.0.s8 %v484
    %v486 = vlaneseq
    %v487 = vshrl.u32 %v486, 7
    %v488 = vsub.s32 %v485, %v487
    %v489 = vrot.slane %v467, %v488
    %v491 = vunpack.c.l.s4 1983009808
    %v492 = vunpack.c.0.s8 %v491
    %v493 = vlaneseq
    %v494 = vshrl.u32 %v493, 7
    %v495 = vsub.s32 %v492, %v494
    %v496 = vrot.slane %v468, %v495
    %v497 = vcombine.low %v475, %v489
    %v498 = vcombine.high %v475, %v489
    %v499 = vcombine.low %v482, %v496
    %v500 = vcombine.high %v482, %v496
    %v501 = vcombine.low %v82, %v84
    %v502 = vcombine.high %v82, %v84
    %v503 = vcombine.low %v86, %v88
    %v504 = vcombine.high %v86, %v88
    %v506 = vunpack.c.l.s4 1983009808
    %v507 = vunpack.c.0.s8 %v506
    %v508 = vlaneseq
    %v509 = vshrl.u32 %v508, 7
    %v510 = vsub.s32 %v507, %v509
    %v511 = vrot.slane %v501, %v510
    %v513 = vunpack.c.l.s4 1983009808
    %v514 = vunpack.c.0.s8 %v513
    %v515 = vlaneseq
    %v516 = vshrl.u32 %v515, 7
    %v517 = vsub.s32 %v514, %v516
    %v518 = vrot.slane %v502, %v517
    %v520 = vunpack.c.l.s4 1983009808
    %v521 = vunpack.c.0.s8 %v520
    %v522 = vlaneseq
    %v523 = vshrl.u32 %v522, 7
    %v524 = vsub.s32 %v521, %v523
    %v525 = vrot.slane %v503, %v524
    %v527 = vunpack.c.l.s4 1983009808
    %v528 = vunpack.c.0.s8 %v527
    %v529 = vlaneseq
    %v530 = vshrl.u32 %v529, 7
    %v531 = vsub.s32 %v528, %v530
    %v532 = vrot.slane %v504, %v531
    %v533 = vcombine.low %v511, %v525
    %v534 = vcombine.high %v511, %v525
    %v535 = vcombine.low %v518, %v532
    %v536 = vcombine.high %v518, %v532
    %v537 = vcombine.low %v89, %v91
    %v538 = vcombine.high %v89, %v91
    %v539 = vcombine.low %v93, %v95
    %v540 = vcombine.high %v93, %v95
    %v542 = vunpack.c.l.s4 1983009808
    %v543 = vunpack.c.0.s8 %v542
    %v544 = vlaneseq
    %v545 = vshrl.u32 %v544, 7
    %v546 = vsub.s32 %v543, %v545
    %v547 = vrot.slane %v537, %v546
    %v549 = vunpack.c.l.s4 1983009808
    %v550 = vunpack.c.0.s8 %v549
    %v551 = vlaneseq
    %v552 = vshrl.u32 %v551, 7
    %v553 = vsub.s32 %v550, %v552
    %v554 = vrot.slane %v538, %v553
    %v556 = vunpack.c.l.s4 1983009808
    %v557 = vunpack.c.0.s8 %v556
    %v558 = vlaneseq
    %v559 = vshrl.u32 %v558, 7
    %v560 = vsub.s32 %v557, %v559
    %v561 = vrot.slane %v539, %v560
    %v563 = vunpack.c.l.s4 1983009808
    %v564 = vunpack.c.0.s8 %v563
    %v565 = vlaneseq
    %v566 = vshrl.u32 %v565, 7
    %v567 = vsub.s32 %v564, %v566
    %v568 = vrot.slane %v540, %v567
    %v569 = vcombine.low %v547, %v561
    %v570 = vcombine.high %v547, %v561
    %v571 = vcombine.low %v554, %v568
    %v572 = vcombine.high %v554, %v568
    %v573 = vcombine.low %v90, %v92
    %v574 = vcombine.high %v90, %v92
    %v575 = vcombine.low %v94, %v96
    %v576 = vcombine.high %v94, %v96
    %v578 = vunpack.c.l.s4 1983009808
    %v579 = vunpack.c.0.s8 %v578
    %v580 = vlaneseq
    %v581 = vshrl.u32 %v580, 7
    %v582 = vsub.s32 %v579, %v581
    %v583 = vrot.slane %v573, %v582
    %v585 = vunpack.c.l.s4 1983009808
    %v586 = vunpack.c.0.s8 %v585
    %v587 = vlaneseq
    %v588 = vshrl.u32 %v587, 7
    %v589 = vsub.s32 %v586, %v588
    %v590 = vrot.slane %v574, %v589
    %v592 = vunpack.c.l.s4 1983009808
    %v593 = vunpack.c.0.s8 %v592
    %v594 = vlaneseq
    %v595 = vshrl.u32 %v594, 7
    %v596 = vsub.s32 %v593, %v595
    %v597 = vrot.slane %v575, %v596
    %v599 = vunpack.c.l.s4 1983009808
    %v600 = vunpack.c.0.s8 %v599
    %v601 = vlaneseq
    %v602 = vshrl.u32 %v601, 7
    %v603 = vsub.s32 %v600, %v602
    %v604 = vrot.slane %v576, %v603
    %v605 = vcombine.low %v583, %v597
    %v606 = vcombine.high %v583, %v597
    %v607 = vcombine.low %v590, %v604
    %v608 = vcombine.high %v590, %v604
    %v609 = vcombine.low %v97, %v99
    %v610 = vcombine.high %v97, %v99
    %v611 = vcombine.low %v101, %v103
    %v612 = vcombine.high %v101, %v103
    %v614 = vunpack.c.l.s4 1983009808
    %v615 = vunpack.c.0.s8 %v614
    %v616 = vlaneseq
    %v617 = vshrl.u32 %v616, 7
    %v618 = vsub.s32 %v615, %v617
    %v619 = vrot.slane %v609, %v618
    %v621 = vunpack.c.l.s4 1983009808
    %v622 = vunpack.c.0.s8 %v621
    %v623 = vlaneseq
    %v624 = vshrl.u32 %v623, 7
    %v625 = vsub.s32 %v622, %v624
    %v626 = vrot.slane %v610, %v625
    %v628 = vunpack.c.l.s4 1983009808
    %v629 = vunpack.c.0.s8 %v628
    %v630 = vlaneseq
    %v631 = vshrl.u32 %v630, 7
    %v632 = vsub.s32 %v629, %v631
    %v633 = vrot.slane %v611, %v632
    %v635 = vunpack.c.l.s4 1983009808
    %v636 = vunpack.c.0.s8 %v635
    %v637 = vlaneseq
    %v638 = vshrl.u32 %v637, 7
    %v639 = vsub.s32 %v636, %v638
    %v640 = vrot.slane %v612, %v639
    %v641 = vcombine.low %v619, %v633
    %v642 = vcombine.high %v619, %v633
    %v643 = vcombine.low %v626, %v640
    %v644 = vcombine.high %v626, %v640
    %v645 = vcombine.low %v98, %v100
    %v646 = vcombine.high %v98, %v100
    %v647 = vcombine.low %v102, %v104
    %v648 = vcombine.high %v102, %v104
    %v650 = vunpack.c.l.s4 1983009808
    %v651 = vunpack.c.0.s8 %v650
    %v652 = vlaneseq
    %v653 = vshrl.u32 %v652, 7
    %v654 = vsub.s32 %v651, %v653
    %v655 = vrot.slane %v645, %v654
    %v657 = vunpack.c.l.s4 1983009808
    %v658 = vunpack.c.0.s8 %v657
    %v659 = vlaneseq
    %v660 = vshrl.u32 %v659, 7
    %v661 = vsub.s32 %v658, %v660
    %v662 = vrot.slane %v646, %v661
    %v664 = vunpack.c.l.s4 1983009808
    %v665 = vunpack.c.0.s8 %v664
    %v666 = vlaneseq
    %v667 = vshrl.u32 %v666, 7
    %v668 = vsub.s32 %v665, %v667
    %v669 = vrot.slane %v647, %v668
    %v671 = vunpack.c.l.s4 1983009808
    %v672 = vunpack.c.0.s8 %v671
    %v673 = vlaneseq
    %v674 = vshrl.u32 %v673, 7
    %v675 = vsub.s32 %v672, %v674
    %v676 = vrot.slane %v648, %v675
    %v677 = vcombine.low %v655, %v669
    %v678 = vcombine.high %v655, %v669
    %v679 = vcombine.low %v662, %v676
    %v680 = vcombine.high %v662, %v676
    %v681 = vcombine.low %v105, %v107
    %v682 = vcombine.high %v105, %v107
    %v683 = vcombine.low %v109, %v111
    %v684 = vcombine.high %v109, %v111
    %v686 = vunpack.c.l.s4 1983009808
    %v687 = vunpack.c.0.s8 %v686
    %v688 = vlaneseq
    %v689 = vshrl.u32 %v688, 7
    %v690 = vsub.s32 %v687, %v689
    %v691 = vrot.slane %v681, %v690
    %v693 = vunpack.c.l.s4 1983009808
    %v694 = vunpack.c.0.s8 %v693
    %v695 = vlaneseq
    %v696 = vshrl.u32 %v695, 7
    %v697 = vsub.s32 %v694, %v696
    %v698 = vrot.slane %v682, %v697
    %v700 = vunpack.c.l.s4 1983009808
    %v701 = vunpack.c.0.s8 %v700
    %v702 = vlaneseq
    %v703 = vshrl.u32 %v702, 7
    %v704 = vsub.s32 %v701, %v703
    %v705 = vrot.slane %v683, %v704
    %v707 = vunpack.c.l.s4 1983009808
    %v708 = vunpack.c.0.s8 %v707
    %v709 = vlaneseq
    %v710 = vshrl.u32 %v709, 7
    %v711 = vsub.s32 %v708, %v710
    %v712 = vrot.slane %v684, %v711
    %v713 = vcombine.low %v691, %v705
    %v714 = vcombine.high %v691, %v705
    %v715 = vcombine.low %v698, %v712
    %v716 = vcombine.high %v698, %v712
    %v717 = vcombine.low %v106, %v108
    %v718 = vcombine.high %v106, %v108
    %v719 = vcombine.low %v110, %v112
    %v720 = vcombine.high %v110, %v112
    %v722 = vunpack.c.l.s4 1983009808
    %v723 = vunpack.c.0.s8 %v722
    %v724 = vlaneseq
    %v725 = vshrl.u32 %v724, 7
    %v726 = vsub.s32 %v723, %v725
    %v727 = vrot.slane %v717, %v726
    %v729 = vunpack.c.l.s4 1983009808
    %v730 = vunpack.c.0.s8 %v729
    %v731 = vlaneseq
    %v732 = vshrl.u32 %v731, 7
    %v733 = vsub.s32 %v730, %v732
    %v734 = vrot.slane %v718, %v733
    %v736 = vunpack.c.l.s4 1983009808
    %v737 = vunpack.c.0.s8 %v736
    %v738 = vlaneseq
    %v739 = vshrl.u32 %v738, 7
    %v740 = vsub.s32 %v737, %v739
    %v741 = vrot.slane %v719, %v740
    %v743 = vunpack.c.l.s4 1983009808
    %v744 = vunpack.c.0.s8 %v743
    %v745 = vlaneseq
    %v746 = vshrl.u32 %v745, 7
    %v747 = vsub.s32 %v744, %v746
    %v748 = vrot.slane %v720, %v747
    %v749 = vcombine.low %v727, %v741
    %v750 = vcombine.high %v727, %v741
    %v751 = vcombine.low %v734, %v748
    %v752 = vcombine.high %v734, %v748
    %v753 = vcombine.low %v113, %v115
    %v754 = vcombine.high %v113, %v115
    %v755 = vcombine.low %v117, %v119
    %v756 = vcombine.high %v117, %v119
    %v758 = vunpack.c.l.s4 1983009808
    %v759 = vunpack.c.0.s8 %v758
    %v760 = vlaneseq
    %v761 = vshrl.u32 %v760, 7
    %v762 = vsub.s32 %v759, %v761
    %v763 = vrot.slane %v753, %v762
    %v765 = vunpack.c.l.s4 1983009808
    %v766 = vunpack.c.0.s8 %v765
    %v767 = vlaneseq
    %v768 = vshrl.u32 %v767, 7
    %v769 = vsub.s32 %v766, %v768
    %v770 = vrot.slane %v754, %v769
    %v772 = vunpack.c.l.s4 1983009808
    %v773 = vunpack.c.0.s8 %v772
    %v774 = vlaneseq
    %v775 = vshrl.u32 %v774, 7
    %v776 = vsub.s32 %v773, %v775
    %v777 = vrot.slane %v755, %v776
    %v779 = vunpack.c.l.s4 1983009808
    %v780 = vunpack.c.0.s8 %v779
    %v781 = vlaneseq
    %v782 = vshrl.u32 %v781, 7
    %v783 = vsub.s32 %v780, %v782
    %v784 = vrot.slane %v756, %v783
    %v785 = vcombine.low %v763, %v777
    %v786 = vcombine.high %v763, %v777
    %v787 = vcombine.low %v770, %v784
    %v788 = vcombine.high %v770, %v784
    %v789 = vcombine.low %v114, %v116
    %v790 = vcombine.high %v114, %v116
    %v791 = vcombine.low %v118, %v120
    %v792 = vcombine.high %v118, %v120
    %v794 = vunpack.c.l.s4 1983009808
    %v795 = vunpack.c.0.s8 %v794
    %v796 = vlaneseq
    %v797 = vshrl.u32 %v796, 7
    %v798 = vsub.s32 %v795, %v797
    %v799 = vrot.slane %v789, %v798
    %v801 = vunpack.c.l.s4 1983009808
    %v802 = vunpack.c.0.s8 %v801
    %v803 = vlaneseq
    %v804 = vshrl.u32 %v803, 7
    %v805 = vsub.s32 %v802, %v804
    %v806 = vrot.slane %v790, %v805
    %v808 = vunpack.c.l.s4 1983009808
    %v809 = vunpack.c.0.s8 %v808
    %v810 = vlaneseq
    %v811 = vshrl.u32 %v810, 7
    %v812 = vsub.s32 %v809, %v811
    %v813 = vrot.slane %v791, %v812
    %v815 = vunpack.c.l.s4 1983009808
    %v816 = vunpack.c.0.s8 %v815
    %v817 = vlaneseq
    %v818 = vshrl.u32 %v817, 7
    %v819 = vsub.s32 %v816, %v818
    %v820 = vrot.slane %v792, %v819
    %v821 = vcombine.low %v799, %v813
    %v822 = vcombine.high %v799, %v813
    %v823 = vcombine.low %v806, %v820
    %v824 = vcombine.high %v806, %v820
    %v825 = vcombine.low %v121, %v123
    %v826 = vcombine.high %v121, %v123
    %v827 = vcombine.low %v125, %v127
    %v828 = vcombine.high %v125, %v127
    %v830 = vunpack.c.l.s4 1983009808
    %v831 = vunpack.c.0.s8 %v830
    %v832 = vlaneseq
    %v833 = vshrl.u32 %v832, 7
    %v834 = vsub.s32 %v831, %v833
    %v835 = vrot.slane %v825, %v834
    %v837 = vunpack.c.l.s4 1983009808
    %v838 = vunpack.c.0.s8 %v837
    %v839 = vlaneseq
    %v840 = vshrl.u32 %v839, 7
    %v841 = vsub.s32 %v838, %v840
    %v842 = vrot.slane %v826, %v841
    %v844 = vunpack.c.l.s4 1983009808
    %v845 = vunpack.c.0.s8 %v844
    %v846 = vlaneseq
    %v847 = vshrl.u32 %v846, 7
    %v848 = vsub.s32 %v845, %v847
    %v849 = vrot.slane %v827, %v848
    %v851 = vunpack.c.l.s4 1983009808
    %v852 = vunpack.c.0.s8 %v851
    %v853 = vlaneseq
    %v854 = vshrl.u32 %v853, 7
    %v855 = vsub.s32 %v852, %v854
    %v856 = vrot.slane %v828, %v855
    %v857 = vcombine.low %v835, %v849
    %v858 = vcombine.high %v835, %v849
    %v859 = vcombine.low %v842, %v856
    %v860 = vcombine.high %v842, %v856
    %v861 = vcombine.low %v122, %v124
    %v862 = vcombine.high %v122, %v124
    %v863 = vcombine.low %v126, %v128
    %v864 = vcombine.high %v126, %v128
    %v866 = vunpack.c.l.s4 1983009808
    %v867 = vunpack.c.0.s8 %v866
    %v868 = vlaneseq
    %v869 = vshrl.u32 %v868, 7
    %v870 = vsub.s32 %v867, %v869
    %v871 = vrot.slane %v861, %v870
    %v873 = vunpack.c.l.s4 1983009808
    %v874 = vunpack.c.0.s8 %v873
    %v875 = vlaneseq
    %v876 = vshrl.u32 %v875, 7
    %v877 = vsub.s32 %v874, %v876
    %v878 = vrot.slane %v862, %v877
    %v880 = vunpack.c.l.s4 1983009808
    %v881 = vunpack.c.0.s8 %v880
    %v882 = vlaneseq
    %v883 = vshrl.u32 %v882, 7
    %v884 = vsub.s32 %v881, %v883
    %v885 = vrot.slane %v863, %v884
    %v887 = vunpack.c.l.s4 1983009808
    %v888 = vunpack.c.0.s8 %v887
    %v889 = vlaneseq
    %v890 = vshrl.u32 %v889, 7
    %v891 = vsub.s32 %v888, %v890
    %v892 = vrot.slane %v864, %v891
    %v893 = vcombine.low %v871, %v885
    %v894 = vcombine.high %v871, %v885
    %v895 = vcombine.low %v878, %v892
    %v896 = vcombine.high %v878, %v892
    %v897 = vcombine.low %v129, %v131
    %v898 = vcombine.high %v129, %v131
    %v899 = vcombine.low %v133, %v135
    %v900 = vcombine.high %v133, %v135
    %v902 = vunpack.c.l.s4 1983009808
    %v903 = vunpack.c.0.s8 %v902
    %v904 = vlaneseq
    %v905 = vshrl.u32 %v904, 7
    %v906 = vsub.s32 %v903, %v905
    %v907 = vrot.slane %v897, %v906
    %v909 = vunpack.c.l.s4 1983009808
    %v910 = vunpack.c.0.s8 %v909
    %v911 = vlaneseq
    %v912 = vshrl.u32 %v911, 7
    %v913 = vsub.s32 %v910, %v912
    %v914 = vrot.slane %v898, %v913
    %v916 = vunpack.c.l.s4 1983009808
    %v917 = vunpack.c.0.s8 %v916
    %v918 = vlaneseq
    %v919 = vshrl.u32 %v918, 7
    %v920 = vsub.s32 %v917, %v919
    %v921 = vrot.slane %v899, %v920
    %v923 = vunpack.c.l.s4 1983009808
    %v924 = vunpack.c.0.s8 %v923
    %v925 = vlaneseq
    %v926 = vshrl.u32 %v925, 7
    %v927 = vsub.s32 %v924, %v926
    %v928 = vrot.slane %v900, %v927
    %v929 = vcombine.low %v907, %v921
    %v930 = vcombine.high %v907, %v921
    %v931 = vcombine.low %v914, %v928
    %v932 = vcombine.high %v914, %v928
    %v933 = vcombine.low %v130, %v132
    %v934 = vcombine.high %v130, %v132
    %v935 = vcombine.low %v134, %v136
    %v936 = vcombine.high %v134, %v136
    %v938 = vunpack.c.l.s4 1983009808
    %v939 = vunpack.c.0.s8 %v938
    %v940 = vlaneseq
    %v941 = vshrl.u32 %v940, 7
    %v942 = vsub.s32 %v939, %v941
    %v943 = vrot.slane %v933, %v942
    %v945 = vunpack.c.l.s4 1983009808
    %v946 = vunpack.c.0.s8 %v945
    %v947 = vlaneseq
    %v948 = vshrl.u32 %v947, 7
    %v949 = vsub.s32 %v946, %v948
    %v950 = vrot.slane %v934, %v949
    %v952 = vunpack.c.l.s4 1983009808
    %v953 = vunpack.c.0.s8 %v952
    %v954 = vlaneseq
    %v955 = vshrl.u32 %v954, 7
    %v956 = vsub.s32 %v953, %v955
    %v957 = vrot.slane %v935, %v956
    %v959 = vunpack.c.l.s4 1983009808
    %v960 = vunpack.c.0.s8 %v959
    %v961 = vlaneseq
    %v962 = vshrl.u32 %v961, 7
    %v963 = vsub.s32 %v960, %v962
    %v964 = vrot.slane %v936, %v963
    %v965 = vcombine.low %v943, %v957
    %v966 = vcombine.high %v943, %v957
    %v967 = vcombine.low %v950, %v964
    %v968 = vcombine.high %v950, %v964
    %v969 = vcombine.low %v137, %v139
    %v970 = vcombine.high %v137, %v139
    %v971 = vcombine.low %v141, %v143
    %v972 = vcombine.high %v141, %v143
    %v974 = vunpack.c.l.s4 1983009808
    %v975 = vunpack.c.0.s8 %v974
    %v976 = vlaneseq
    %v977 = vshrl.u32 %v976, 7
    %v978 = vsub.s32 %v975, %v977
    %v979 = vrot.slane %v969, %v978
    %v981 = vunpack.c.l.s4 1983009808
    %v982 = vunpack.c.0.s8 %v981
    %v983 = vlaneseq
    %v984 = vshrl.u32 %v983, 7
    %v985 = vsub.s32 %v982, %v984
    %v986 = vrot.slane %v970, %v985
    %v988 = vunpack.c.l.s4 1983009808
    %v989 = vunpack.c.0.s8 %v988
    %v990 = vlaneseq
    %v991 = vshrl.u32 %v990, 7
    %v992 = vsub.s32 %v989, %v991
    %v993 = vrot.slane %v971, %v992
    %v995 = vunpack.c.l.s4 1983009808
    %v996 = vunpack.c.0.s8 %v995
    %v997 = vlaneseq
    %v998 = vshrl.u32 %v997, 7
    %v999 = vsub.s32 %v996, %v998
    %v1000 = vrot.slane %v972, %v999
    %v1001 = vcombine.low %v979, %v993
    %v1002 = vcombine.high %v979, %v993
    %v1003 = vcombine.low %v986, %v1000
    %v1004 = vcombine.high %v986, %v1000
    %v1005 = vcombine.low %v138, %v140
    %v1006 = vcombine.high %v138, %v140
    %v1007 = vcombine.low %v142, %v144
    %v1008 = vcombine.high %v142, %v144
    %v1010 = vunpack.c.l.s4 1983009808
    %v1011 = vunpack.c.0.s8 %v1010
    %v1012 = vlaneseq
    %v1013 = vshrl.u32 %v1012, 7
    %v1014 = vsub.s32 %v1011, %v1013
    %v1015 = vrot.slane %v1005, %v1014
    %v1017 = vunpack.c.l.s4 1983009808
    %v1018 = vunpack.c.0.s8 %v1017
    %v1019 = vlaneseq
    %v1020 = vshrl.u32 %v1019, 7
    %v1021 = vsub.s32 %v1018, %v1020
    %v1022 = vrot.slane %v1006, %v1021
    %v1024 = vunpack.c.l.s4 1983009808
    %v1025 = vunpack.c.0.s8 %v1024
    %v1026 = vlaneseq
    %v1027 = vshrl.u32 %v1026, 7
    %v1028 = vsub.s32 %v1025, %v1027
    %v1029 = vrot.slane %v1007, %v1028
    %v1031 = vunpack.c.l.s4 1983009808
    %v1032 = vunpack.c.0.s8 %v1031
    %v1033 = vlaneseq
    %v1034 = vshrl.u32 %v1033, 7
    %v1035 = vsub.s32 %v1032, %v1034
    %v1036 = vrot.slane %v1008, %v1035
    %v1037 = vcombine.low %v1015, %v1029
    %v1038 = vcombine.high %v1015, %v1029
    %v1039 = vcombine.low %v1022, %v1036
    %v1040 = vcombine.high %v1022, %v1036
    %v1041 = vcombine.low %v145, %v147
    %v1042 = vcombine.high %v145, %v147
    %v1043 = vcombine.low %v149, %v151
    %v1044 = vcombine.high %v149, %v151
    %v1046 = vunpack.c.l.s4 1983009808
    %v1047 = vunpack.c.0.s8 %v1046
    %v1048 = vlaneseq
    %v1049 = vshrl.u32 %v1048, 7
    %v1050 = vsub.s32 %v1047, %v1049
    %v1051 = vrot.slane %v1041, %v1050
    %v1053 = vunpack.c.l.s4 1983009808
    %v1054 = vunpack.c.0.s8 %v1053
    %v1055 = vlaneseq
    %v1056 = vshrl.u32 %v1055, 7
    %v1057 = vsub.s32 %v1054, %v1056
    %v1058 = vrot.slane %v1042, %v1057
    %v1060 = vunpack.c.l.s4 1983009808
    %v1061 = vunpack.c.0.s8 %v1060
    %v1062 = vlaneseq
    %v1063 = vshrl.u32 %v1062, 7
    %v1064 = vsub.s32 %v1061, %v1063
    %v1065 = vrot.slane %v1043, %v1064
    %v1067 = vunpack.c.l.s4 1983009808
    %v1068 = vunpack.c.0.s8 %v1067
    %v1069 = vlaneseq
    %v1070 = vshrl.u32 %v1069, 7
    %v1071 = vsub.s32 %v1068, %v1070
    %v1072 = vrot.slane %v1044, %v1071
    %v1073 = vcombine.low %v1051, %v1065
    %v1074 = vcombine.high %v1051, %v1065
    %v1075 = vcombine.low %v1058, %v1072
    %v1076 = vcombine.high %v1058, %v1072
    %v1077 = vcombine.low %v146, %v148
    %v1078 = vcombine.high %v146, %v148
    %v1079 = vcombine.low %v150, %v152
    %v1080 = vcombine.high %v150, %v152
    %v1082 = vunpack.c.l.s4 1983009808
    %v1083 = vunpack.c.0.s8 %v1082
    %v1084 = vlaneseq
    %v1085 = vshrl.u32 %v1084, 7
    %v1086 = vsub.s32 %v1083, %v1085
    %v1087 = vrot.slane %v1077, %v1086
    %v1089 = vunpack.c.l.s4 1983009808
    %v1090 = vunpack.c.0.s8 %v1089
    %v1091 = vlaneseq
    %v1092 = vshrl.u32 %v1091, 7
    %v1093 = vsub.s32 %v1090, %v1092
    %v1094 = vrot.slane %v1078, %v1093
    %v1096 = vunpack.c.l.s4 1983009808
    %v1097 = vunpack.c.0.s8 %v1096
    %v1098 = vlaneseq
    %v1099 = vshrl.u32 %v1098, 7
    %v1100 = vsub.s32 %v1097, %v1099
    %v1101 = vrot.slane %v1079, %v1100
    %v1103 = vunpack.c.l.s4 1983009808
    %v1104 = vunpack.c.0.s8 %v1103
    %v1105 = vlaneseq
    %v1106 = vshrl.u32 %v1105, 7
    %v1107 = vsub.s32 %v1104, %v1106
    %v1108 = vrot.slane %v1080, %v1107
    %v1109 = vcombine.low %v1087, %v1101
    %v1110 = vcombine.high %v1087, %v1101
    %v1111 = vcombine.low %v1094, %v1108
    %v1112 = vcombine.high %v1094, %v1108
    %v1113 = vcombine.low %v153, %v155
    %v1114 = vcombine.high %v153, %v155
    %v1115 = vcombine.low %v157, %v159
    %v1116 = vcombine.high %v157, %v159
    %v1118 = vunpack.c.l.s4 1983009808
    %v1119 = vunpack.c.0.s8 %v1118
    %v1120 = vlaneseq
    %v1121 = vshrl.u32 %v1120, 7
    %v1122 = vsub.s32 %v1119, %v1121
    %v1123 = vrot.slane %v1113, %v1122
    %v1125 = vunpack.c.l.s4 1983009808
    %v1126 = vunpack.c.0.s8 %v1125
    %v1127 = vlaneseq
    %v1128 = vshrl.u32 %v1127, 7
    %v1129 = vsub.s32 %v1126, %v1128
    %v1130 = vrot.slane %v1114, %v1129
    %v1132 = vunpack.c.l.s4 1983009808
    %v1133 = vunpack.c.0.s8 %v1132
    %v1134 = vlaneseq
    %v1135 = vshrl.u32 %v1134, 7
    %v1136 = vsub.s32 %v1133, %v1135
    %v1137 = vrot.slane %v1115, %v1136
    %v1139 = vunpack.c.l.s4 1983009808
    %v1140 = vunpack.c.0.s8 %v1139
    %v1141 = vlaneseq
    %v1142 = vshrl.u32 %v1141, 7
    %v1143 = vsub.s32 %v1140, %v1142
    %v1144 = vrot.slane %v1116, %v1143
    %v1145 = vcombine.low %v1123, %v1137
    %v1146 = vcombine.high %v1123, %v1137
    %v1147 = vcombine.low %v1130, %v1144
    %v1148 = vcombine.high %v1130, %v1144
    %v1149 = vcombine.low %v154, %v156
    %v1150 = vcombine.high %v154, %v156
    %v1151 = vcombine.low %v158, %v160
    %v1152 = vcombine.high %v158, %v160
    %v1154 = vunpack.c.l.s4 1983009808
    %v1155 = vunpack.c.0.s8 %v1154
    %v1156 = vlaneseq
    %v1157 = vshrl.u32 %v1156, 7
    %v1158 = vsub.s32 %v1155, %v1157
    %v1159 = vrot.slane %v1149, %v1158
    %v1161 = vunpack.c.l.s4 1983009808
    %v1162 = vunpack.c.0.s8 %v1161
    %v1163 = vlaneseq
    %v1164 = vshrl.u32 %v1163, 7
    %v1165 = vsub.s32 %v1162, %v1164
    %v1166 = vrot.slane %v1150, %v1165
    %v1168 = vunpack.c.l.s4 1983009808
    %v1169 = vunpack.c.0.s8 %v1168
    %v1170 = vlaneseq
    %v1171 = vshrl.u32 %v1170, 7
    %v1172 = vsub.s32 %v1169, %v1171
    %v1173 = vrot.slane %v1151, %v1172
    %v1175 = vunpack.c.l.s4 1983009808
    %v1176 = vunpack.c.0.s8 %v1175
    %v1177 = vlaneseq
    %v1178 = vshrl.u32 %v1177, 7
    %v1179 = vsub.s32 %v1176, %v1178
    %v1180 = vrot.slane %v1152, %v1179
    %v1181 = vcombine.low %v1159, %v1173
    %v1182 = vcombine.high %v1159, %v1173
    %v1183 = vcombine.low %v1166, %v1180
    %v1184 = vcombine.high %v1166, %v1180
    %v1185 = vcombine.low %v161, %v163
    %v1186 = vcombine.high %v161, %v163
    %v1187 = vcombine.low %v165, %v167
    %v1188 = vcombine.high %v165, %v167
    %v1190 = vunpack.c.l.s4 1983009808
    %v1191 = vunpack.c.0.s8 %v1190
    %v1192 = vlaneseq
    %v1193 = vshrl.u32 %v1192, 7
    %v1194 = vsub.s32 %v1191, %v1193
    %v1195 = vrot.slane %v1185, %v1194
    %v1197 = vunpack.c.l.s4 1983009808
    %v1198 = vunpack.c.0.s8 %v1197
    %v1199 = vlaneseq
    %v1200 = vshrl.u32 %v1199, 7
    %v1201 = vsub.s32 %v1198, %v1200
    %v1202 = vrot.slane %v1186, %v1201
    %v1204 = vunpack.c.l.s4 1983009808
    %v1205 = vunpack.c.0.s8 %v1204
    %v1206 = vlaneseq
    %v1207 = vshrl.u32 %v1206, 7
    %v1208 = vsub.s32 %v1205, %v1207
    %v1209 = vrot.slane %v1187, %v1208
    %v1211 = vunpack.c.l.s4 1983009808
    %v1212 = vunpack.c.0.s8 %v1211
    %v1213 = vlaneseq
    %v1214 = vshrl.u32 %v1213, 7
    %v1215 = vsub.s32 %v1212, %v1214
    %v1216 = vrot.slane %v1188, %v1215
    %v1217 = vcombine.low %v1195, %v1209
    %v1218 = vcombine.high %v1195, %v1209
    %v1219 = vcombine.low %v1202, %v1216
    %v1220 = vcombine.high %v1202, %v1216
    %v1221 = vcombine.low %v162, %v164
    %v1222 = vcombine.high %v162, %v164
    %v1223 = vcombine.low %v166, %v168
    %v1224 = vcombine.high %v166, %v168
    %v1226 = vunpack.c.l.s4 1983009808
    %v1227 = vunpack.c.0.s8 %v1226
    %v1228 = vlaneseq
    %v1229 = vshrl.u32 %v1228, 7
    %v1230 = vsub.s32 %v1227, %v1229
    %v1231 = vrot.slane %v1221, %v1230
    %v1233 = vunpack.c.l.s4 1983009808
    %v1234 = vunpack.c.0.s8 %v1233
    %v1235 = vlaneseq
    %v1236 = vshrl.u32 %v1235, 7
    %v1237 = vsub.s32 %v1234, %v1236
    %v1238 = vrot.slane %v1222, %v1237
    %v1240 = vunpack.c.l.s4 1983009808
    %v1241 = vunpack.c.0.s8 %v1240
    %v1242 = vlaneseq
    %v1243 = vshrl.u32 %v1242, 7
    %v1244 = vsub.s32 %v1241, %v1243
    %v1245 = vrot.slane %v1223, %v1244
    %v1247 = vunpack.c.l.s4 1983009808
    %v1248 = vunpack.c.0.s8 %v1247
    %v1249 = vlaneseq
    %v1250 = vshrl.u32 %v1249, 7
    %v1251 = vsub.s32 %v1248, %v1250
    %v1252 = vrot.slane %v1224, %v1251
    %v1253 = vcombine.low %v1231, %v1245
    %v1254 = vcombine.high %v1231, %v1245
    %v1255 = vcombine.low %v1238, %v1252
    %v1256 = vcombine.high %v1238, %v1252
    %v1257 = vcombine.low %v169, %v171
    %v1258 = vcombine.high %v169, %v171
    %v1259 = vcombine.low %v173, %v175
    %v1260 = vcombine.high %v173, %v175
    %v1262 = vunpack.c.l.s4 1983009808
    %v1263 = vunpack.c.0.s8 %v1262
    %v1264 = vlaneseq
    %v1265 = vshrl.u32 %v1264, 7
    %v1266 = vsub.s32 %v1263, %v1265
    %v1267 = vrot.slane %v1257, %v1266
    %v1269 = vunpack.c.l.s4 1983009808
    %v1270 = vunpack.c.0.s8 %v1269
    %v1271 = vlaneseq
    %v1272 = vshrl.u32 %v1271, 7
    %v1273 = vsub.s32 %v1270, %v1272
    %v1274 = vrot.slane %v1258, %v1273
    %v1276 = vunpack.c.l.s4 1983009808
    %v1277 = vunpack.c.0.s8 %v1276
    %v1278 = vlaneseq
    %v1279 = vshrl.u32 %v1278, 7
    %v1280 = vsub.s32 %v1277, %v1279
    %v1281 = vrot.slane %v1259, %v1280
    %v1283 = vunpack.c.l.s4 1983009808
    %v1284 = vunpack.c.0.s8 %v1283
    %v1285 = vlaneseq
    %v1286 = vshrl.u32 %v1285, 7
    %v1287 = vsub.s32 %v1284, %v1286
    %v1288 = vrot.slane %v1260, %v1287
    %v1289 = vcombine.low %v1267, %v1281
    %v1290 = vcombine.high %v1267, %v1281
    %v1291 = vcombine.low %v1274, %v1288
    %v1292 = vcombine.high %v1274, %v1288
    %v1293 = vcombine.low %v170, %v172
    %v1294 = vcombine.high %v170, %v172
    %v1295 = vcombine.low %v174, %v176
    %v1296 = vcombine.high %v174, %v176
    %v1298 = vunpack.c.l.s4 1983009808
    %v1299 = vunpack.c.0.s8 %v1298
    %v1300 = vlaneseq
    %v1301 = vshrl.u32 %v1300, 7
    %v1302 = vsub.s32 %v1299, %v1301
    %v1303 = vrot.slane %v1293, %v1302
    %v1305 = vunpack.c.l.s4 1983009808
    %v1306 = vunpack.c.0.s8 %v1305
    %v1307 = vlaneseq
    %v1308 = vshrl.u32 %v1307, 7
    %v1309 = vsub.s32 %v1306, %v1308
    %v1310 = vrot.slane %v1294, %v1309
    %v1312 = vunpack.c.l.s4 1983009808
    %v1313 = vunpack.c.0.s8 %v1312
    %v1314 = vlaneseq
    %v1315 = vshrl.u32 %v1314, 7
    %v1316 = vsub.s32 %v1313, %v1315
    %v1317 = vrot.slane %v1295, %v1316
    %v1319 = vunpack.c.l.s4 1983009808
    %v1320 = vunpack.c.0.s8 %v1319
    %v1321 = vlaneseq
    %v1322 = vshrl.u32 %v1321, 7
    %v1323 = vsub.s32 %v1320, %v1322
    %v1324 = vrot.slane %v1296, %v1323
    %v1325 = vcombine.low %v1303, %v1317
    %v1326 = vcombine.high %v1303, %v1317
    %v1327 = vcombine.low %v1310, %v1324
    %v1328 = vcombine.high %v1310, %v1324
    %v1329 = vcombine.low %v177, %v179
    %v1330 = vcombine.high %v177, %v179
    %v1331 = vcombine.low %v181, %v183
    %v1332 = vcombine.high %v181, %v183
    %v1334 = vunpack.c.l.s4 1983009808
    %v1335 = vunpack.c.0.s8 %v1334
    %v1336 = vlaneseq
    %v1337 = vshrl.u32 %v1336, 7
    %v1338 = vsub.s32 %v1335, %v1337
    %v1339 = vrot.slane %v1329, %v1338
    %v1341 = vunpack.c.l.s4 1983009808
    %v1342 = vunpack.c.0.s8 %v1341
    %v1343 = vlaneseq
    %v1344 = vshrl.u32 %v1343, 7
    %v1345 = vsub.s32 %v1342, %v1344
    %v1346 = vrot.slane %v1330, %v1345
    %v1348 = vunpack.c.l.s4 1983009808
    %v1349 = vunpack.c.0.s8 %v1348
    %v1350 = vlaneseq
    %v1351 = vshrl.u32 %v1350, 7
    %v1352 = vsub.s32 %v1349, %v1351
    %v1353 = vrot.slane %v1331, %v1352
    %v1355 = vunpack.c.l.s4 1983009808
    %v1356 = vunpack.c.0.s8 %v1355
    %v1357 = vlaneseq
    %v1358 = vshrl.u32 %v1357, 7
    %v1359 = vsub.s32 %v1356, %v1358
    %v1360 = vrot.slane %v1332, %v1359
    %v1361 = vcombine.low %v1339, %v1353
    %v1362 = vcombine.high %v1339, %v1353
    %v1363 = vcombine.low %v1346, %v1360
    %v1364 = vcombine.high %v1346, %v1360
    %v1365 = vcombine.low %v178, %v180
    %v1366 = vcombine.high %v178, %v180
    %v1367 = vcombine.low %v182, %v184
    %v1368 = vcombine.high %v182, %v184
    %v1370 = vunpack.c.l.s4 1983009808
    %v1371 = vunpack.c.0.s8 %v1370
    %v1372 = vlaneseq
    %v1373 = vshrl.u32 %v1372, 7
    %v1374 = vsub.s32 %v1371, %v1373
    %v1375 = vrot.slane %v1365, %v1374
    %v1377 = vunpack.c.l.s4 1983009808
    %v1378 = vunpack.c.0.s8 %v1377
    %v1379 = vlaneseq
    %v1380 = vshrl.u32 %v1379, 7
    %v1381 = vsub.s32 %v1378, %v1380
    %v1382 = vrot.slane %v1366, %v1381
    %v1384 = vunpack.c.l.s4 1983009808
    %v1385 = vunpack.c.0.s8 %v1384
    %v1386 = vlaneseq
    %v1387 = vshrl.u32 %v1386, 7
    %v1388 = vsub.s32 %v1385, %v1387
    %v1389 = vrot.slane %v1367, %v1388
    %v1391 = vunpack.c.l.s4 1983009808
    %v1392 = vunpack.c.0.s8 %v1391
    %v1393 = vlaneseq
    %v1394 = vshrl.u32 %v1393, 7
    %v1395 = vsub.s32 %v1392, %v1394
    %v1396 = vrot.slane %v1368, %v1395
    %v1397 = vcombine.low %v1375, %v1389
    %v1398 = vcombine.high %v1375, %v1389
    %v1399 = vcombine.low %v1382, %v1396
    %v1400 = vcombine.high %v1382, %v1396
    %v1401 = vcombine.low %v185, %v187
    %v1402 = vcombine.high %v185, %v187
    %v1403 = vcombine.low %v189, %v191
    %v1404 = vcombine.high %v189, %v191
    %v1406 = vunpack.c.l.s4 1983009808
    %v1407 = vunpack.c.0.s8 %v1406
    %v1408 = vlaneseq
    %v1409 = vshrl.u32 %v1408, 7
    %v1410 = vsub.s32 %v1407, %v1409
    %v1411 = vrot.slane %v1401, %v1410
    %v1413 = vunpack.c.l.s4 1983009808
    %v1414 = vunpack.c.0.s8 %v1413
    %v1415 = vlaneseq
    %v1416 = vshrl.u32 %v1415, 7
    %v1417 = vsub.s32 %v1414, %v1416
    %v1418 = vrot.slane %v1402, %v1417
    %v1420 = vunpack.c.l.s4 1983009808
    %v1421 = vunpack.c.0.s8 %v1420
    %v1422 = vlaneseq
    %v1423 = vshrl.u32 %v1422, 7
    %v1424 = vsub.s32 %v1421, %v1423
    %v1425 = vrot.slane %v1403, %v1424
    %v1427 = vunpack.c.l.s4 1983009808
    %v1428 = vunpack.c.0.s8 %v1427
    %v1429 = vlaneseq
    %v1430 = vshrl.u32 %v1429, 7
    %v1431 = vsub.s32 %v1428, %v1430
    %v1432 = vrot.slane %v1404, %v1431
    %v1433 = vcombine.low %v1411, %v1425
    %v1434 = vcombine.high %v1411, %v1425
    %v1435 = vcombine.low %v1418, %v1432
    %v1436 = vcombine.high %v1418, %v1432
    %v1437 = vcombine.low %v186, %v188
    %v1438 = vcombine.high %v186, %v188
    %v1439 = vcombine.low %v190, %v192
    %v1440 = vcombine.high %v190, %v192
    %v1442 = vunpack.c.l.s4 1983009808
    %v1443 = vunpack.c.0.s8 %v1442
    %v1444 = vlaneseq
    %v1445 = vshrl.u32 %v1444, 7
    %v1446 = vsub.s32 %v1443, %v1445
    %v1447 = vrot.slane %v1437, %v1446
    %v1449 = vunpack.c.l.s4 1983009808
    %v1450 = vunpack.c.0.s8 %v1449
    %v1451 = vlaneseq
    %v1452 = vshrl.u32 %v1451, 7
    %v1453 = vsub.s32 %v1450, %v1452
    %v1454 = vrot.slane %v1438, %v1453
    %v1456 = vunpack.c.l.s4 1983009808
    %v1457 = vunpack.c.0.s8 %v1456
    %v1458 = vlaneseq
    %v1459 = vshrl.u32 %v1458, 7
    %v1460 = vsub.s32 %v1457, %v1459
    %v1461 = vrot.slane %v1439, %v1460
    %v1463 = vunpack.c.l.s4 1983009808
    %v1464 = vunpack.c.0.s8 %v1463
    %v1465 = vlaneseq
    %v1466 = vshrl.u32 %v1465, 7
    %v1467 = vsub.s32 %v1464, %v1466
    %v1468 = vrot.slane %v1440, %v1467
    %v1469 = vcombine.low %v1447, %v1461
    %v1470 = vcombine.high %v1447, %v1461
    %v1471 = vcombine.low %v1454, %v1468
    %v1472 = vcombine.high %v1454, %v1468
    %v1601 = vpack.c.bf16 %v425, %v353
    %v1602 = vpack.c.bf16 %v426, %v354
    %v1603 = vpack.c.bf16 %v427, %v355
    %v1604 = vpack.c.bf16 %v428, %v356
    %v1605 = vpack.c.bf16 %v461, %v389
    %v1606 = vpack.c.bf16 %v462, %v390
    %v1607 = vpack.c.bf16 %v463, %v391
    %v1608 = vpack.c.bf16 %v464, %v392
    %v1609 = vpack.c.bf16 %v569, %v497
    %v1610 = vpack.c.bf16 %v570, %v498
    %v1611 = vpack.c.bf16 %v571, %v499
    %v1612 = vpack.c.bf16 %v572, %v500
    %v1613 = vpack.c.bf16 %v605, %v533
    %v1614 = vpack.c.bf16 %v606, %v534
    %v1615 = vpack.c.bf16 %v607, %v535
    %v1616 = vpack.c.bf16 %v608, %v536
    %v1617 = vpack.c.bf16 %v713, %v641
    %v1618 = vpack.c.bf16 %v714, %v642
    %v1619 = vpack.c.bf16 %v715, %v643
    %v1620 = vpack.c.bf16 %v716, %v644
    %v1621 = vpack.c.bf16 %v749, %v677
    %v1622 = vpack.c.bf16 %v750, %v678
    %v1623 = vpack.c.bf16 %v751, %v679
    %v1624 = vpack.c.bf16 %v752, %v680
    %v1625 = vpack.c.bf16 %v857, %v785
    %v1626 = vpack.c.bf16 %v858, %v786
    %v1627 = vpack.c.bf16 %v859, %v787
    %v1628 = vpack.c.bf16 %v860, %v788
    %v1629 = vpack.c.bf16 %v893, %v821
    %v1630 = vpack.c.bf16 %v894, %v822
    %v1631 = vpack.c.bf16 %v895, %v823
    %v1632 = vpack.c.bf16 %v896, %v824
    %v1633 = vpack.c.bf16 %v1001, %v929
    %v1634 = vpack.c.bf16 %v1002, %v930
    %v1635 = vpack.c.bf16 %v1003, %v931
    %v1636 = vpack.c.bf16 %v1004, %v932
    %v1637 = vpack.c.bf16 %v1037, %v965
    %v1638 = vpack.c.bf16 %v1038, %v966
    %v1639 = vpack.c.bf16 %v1039, %v967
    %v1640 = vpack.c.bf16 %v1040, %v968
    %v1641 = vpack.c.bf16 %v1145, %v1073
    %v1642 = vpack.c.bf16 %v1146, %v1074
    %v1643 = vpack.c.bf16 %v1147, %v1075
    %v1644 = vpack.c.bf16 %v1148, %v1076
    %v1645 = vpack.c.bf16 %v1181, %v1109
    %v1646 = vpack.c.bf16 %v1182, %v1110
    %v1647 = vpack.c.bf16 %v1183, %v1111
    %v1648 = vpack.c.bf16 %v1184, %v1112
    %v1649 = vpack.c.bf16 %v1289, %v1217
    %v1650 = vpack.c.bf16 %v1290, %v1218
    %v1651 = vpack.c.bf16 %v1291, %v1219
    %v1652 = vpack.c.bf16 %v1292, %v1220
    %v1653 = vpack.c.bf16 %v1325, %v1253
    %v1654 = vpack.c.bf16 %v1326, %v1254
    %v1655 = vpack.c.bf16 %v1327, %v1255
    %v1656 = vpack.c.bf16 %v1328, %v1256
    %v1657 = vpack.c.bf16 %v1433, %v1361
    %v1658 = vpack.c.bf16 %v1434, %v1362
    %v1659 = vpack.c.bf16 %v1435, %v1363
    %v1660 = vpack.c.bf16 %v1436, %v1364
    %v1661 = vpack.c.bf16 %v1469, %v1397
    %v1662 = vpack.c.bf16 %v1470, %v1398
    %v1663 = vpack.c.bf16 %v1471, %v1399
    %v1664 = vpack.c.bf16 %v1472, %v1400
    %v1665 = vld [vmem:[#allocation5] sm:$0xf]
    %v1666 = vld [vmem:[#allocation5 + $0x4] sm:$0xf]
    %v1667 = vld [vmem:[#allocation5 + $0x8] sm:$0xf]
    %v1668 = vld [vmem:[#allocation5 + $0xc] sm:$0xf]
    %v1669 = vld [vmem:[#allocation5 + $0x10] sm:$0xf]
    %v1670 = vld [vmem:[#allocation5 + $0x14] sm:$0xf]
    %v1671 = vld [vmem:[#allocation5 + $0x18] sm:$0xf]
    %v1672 = vld [vmem:[#allocation5 + $0x1c] sm:$0xf]
    %v1673 = vld [vmem:[#allocation5 + $0x20] sm:$0xf]
    %v1674 = vld [vmem:[#allocation5 + $0x24] sm:$0xf]
    %v1675 = vld [vmem:[#allocation5 + $0x28] sm:$0xf]
    %v1676 = vld [vmem:[#allocation5 + $0x2c] sm:$0xf]
    %v1677 = vld [vmem:[#allocation5 + $0x30] sm:$0xf]
    %v1678 = vld [vmem:[#allocation5 + $0x34] sm:$0xf]
    %v1679 = vld [vmem:[#allocation5 + $0x38] sm:$0xf]
    %v1680 = vld [vmem:[#allocation5 + $0x3c] sm:$0xf]
    %v1681 = vld [vmem:[#allocation5 + $0x40] sm:$0xf]
    %v1682 = vld [vmem:[#allocation5 + $0x44] sm:$0xf]
    %v1683 = vld [vmem:[#allocation5 + $0x48] sm:$0xf]
    %v1684 = vld [vmem:[#allocation5 + $0x4c] sm:$0xf]
    %v1685 = vld [vmem:[#allocation5 + $0x50] sm:$0xf]
    %v1686 = vld [vmem:[#allocation5 + $0x54] sm:$0xf]
    %v1687 = vld [vmem:[#allocation5 + $0x58] sm:$0xf]
    %v1688 = vld [vmem:[#allocation5 + $0x5c] sm:$0xf]
    %v1689 = vld [vmem:[#allocation5 + $0x60] sm:$0xf]
    %v1690 = vld [vmem:[#allocation5 + $0x64] sm:$0xf]
    %v1691 = vld [vmem:[#allocation5 + $0x68] sm:$0xf]
    %v1692 = vld [vmem:[#allocation5 + $0x6c] sm:$0xf]
    %v1693 = vld [vmem:[#allocation5 + $0x70] sm:$0xf]
    %v1694 = vld [vmem:[#allocation5 + $0x74] sm:$0xf]
    %v1695 = vld [vmem:[#allocation5 + $0x78] sm:$0xf]
    %v1696 = vld [vmem:[#allocation5 + $0x7c] sm:$0xf]
    %v1697 = vld [vmem:[#allocation5 + $0x80] sm:$0xf]
    %v1698 = vld [vmem:[#allocation5 + $0x84] sm:$0xf]
    %v1699 = vld [vmem:[#allocation5 + $0x88] sm:$0xf]
    %v1700 = vld [vmem:[#allocation5 + $0x8c] sm:$0xf]
    %v1701 = vld [vmem:[#allocation5 + $0x90] sm:$0xf]
    %v1702 = vld [vmem:[#allocation5 + $0x94] sm:$0xf]
    %v1703 = vld [vmem:[#allocation5 + $0x98] sm:$0xf]
    %v1704 = vld [vmem:[#allocation5 + $0x9c] sm:$0xf]
    %v1705 = vld [vmem:[#allocation5 + $0xa0] sm:$0xf]
    %v1706 = vld [vmem:[#allocation5 + $0xa4] sm:$0xf]
    %v1707 = vld [vmem:[#allocation5 + $0xa8] sm:$0xf]
    %v1708 = vld [vmem:[#allocation5 + $0xac] sm:$0xf]
    %v1709 = vld [vmem:[#allocation5 + $0xb0] sm:$0xf]
    %v1710 = vld [vmem:[#allocation5 + $0xb4] sm:$0xf]
    %v1711 = vld [vmem:[#allocation5 + $0xb8] sm:$0xf]
    %v1712 = vld [vmem:[#allocation5 + $0xbc] sm:$0xf]
    %v1713 = vld [vmem:[#allocation5 + $0xc0] sm:$0xf]
    %v1714 = vld [vmem:[#allocation5 + $0xc4] sm:$0xf]
    %v1715 = vld [vmem:[#allocation5 + $0xc8] sm:$0xf]
    %v1716 = vld [vmem:[#allocation5 + $0xcc] sm:$0xf]
    %v1717 = vld [vmem:[#allocation5 + $0xd0] sm:$0xf]
    %v1718 = vld [vmem:[#allocation5 + $0xd4] sm:$0xf]
    %v1719 = vld [vmem:[#allocation5 + $0xd8] sm:$0xf]
    %v1720 = vld [vmem:[#allocation5 + $0xdc] sm:$0xf]
    %v1721 = vld [vmem:[#allocation5 + $0xe0] sm:$0xf]
    %v1722 = vld [vmem:[#allocation5 + $0xe4] sm:$0xf]
    %v1723 = vld [vmem:[#allocation5 + $0xe8] sm:$0xf]
    %v1724 = vld [vmem:[#allocation5 + $0xec] sm:$0xf]
    %v1725 = vld [vmem:[#allocation5 + $0xf0] sm:$0xf]
    %v1726 = vld [vmem:[#allocation5 + $0xf4] sm:$0xf]
    %v1727 = vld [vmem:[#allocation5 + $0xf8] sm:$0xf]
    %v1728 = vld [vmem:[#allocation5 + $0xfc] sm:$0xf]
    %v1729 = vld [vmem:[#allocation5 + $0x100] sm:$0xf]
    %v1730 = vld [vmem:[#allocation5 + $0x104] sm:$0xf]
    %v1731 = vld [vmem:[#allocation5 + $0x108] sm:$0xf]
    %v1732 = vld [vmem:[#allocation5 + $0x10c] sm:$0xf]
    %v1733 = vld [vmem:[#allocation5 + $0x110] sm:$0xf]
    %v1734 = vld [vmem:[#allocation5 + $0x114] sm:$0xf]
    %v1735 = vld [vmem:[#allocation5 + $0x118] sm:$0xf]
    %v1736 = vld [vmem:[#allocation5 + $0x11c] sm:$0xf]
    %v1737 = vld [vmem:[#allocation5 + $0x120] sm:$0xf]
    %v1738 = vld [vmem:[#allocation5 + $0x124] sm:$0xf]
    %v1739 = vld [vmem:[#allocation5 + $0x128] sm:$0xf]
    %v1740 = vld [vmem:[#allocation5 + $0x12c] sm:$0xf]
    %v1741 = vld [vmem:[#allocation5 + $0x130] sm:$0xf]
    %v1742 = vld [vmem:[#allocation5 + $0x134] sm:$0xf]
    %v1743 = vld [vmem:[#allocation5 + $0x138] sm:$0xf]
    %v1744 = vld [vmem:[#allocation5 + $0x13c] sm:$0xf]
    %v1745 = vld [vmem:[#allocation5 + $0x140] sm:$0xf]
    %v1746 = vld [vmem:[#allocation5 + $0x144] sm:$0xf]
    %v1747 = vld [vmem:[#allocation5 + $0x148] sm:$0xf]
    %v1748 = vld [vmem:[#allocation5 + $0x14c] sm:$0xf]
    %v1749 = vld [vmem:[#allocation5 + $0x150] sm:$0xf]
    %v1750 = vld [vmem:[#allocation5 + $0x154] sm:$0xf]
    %v1751 = vld [vmem:[#allocation5 + $0x158] sm:$0xf]
    %v1752 = vld [vmem:[#allocation5 + $0x15c] sm:$0xf]
    %v1753 = vld [vmem:[#allocation5 + $0x160] sm:$0xf]
    %v1754 = vld [vmem:[#allocation5 + $0x164] sm:$0xf]
    %v1755 = vld [vmem:[#allocation5 + $0x168] sm:$0xf]
    %v1756 = vld [vmem:[#allocation5 + $0x16c] sm:$0xf]
    %v1757 = vld [vmem:[#allocation5 + $0x170] sm:$0xf]
    %v1758 = vld [vmem:[#allocation5 + $0x174] sm:$0xf]
    %v1759 = vld [vmem:[#allocation5 + $0x178] sm:$0xf]
    %v1760 = vld [vmem:[#allocation5 + $0x17c] sm:$0xf]
    %v1761 = vld [vmem:[#allocation5 + $0x180] sm:$0xf]
    %v1762 = vld [vmem:[#allocation5 + $0x184] sm:$0xf]
    %v1763 = vld [vmem:[#allocation5 + $0x188] sm:$0xf]
    %v1764 = vld [vmem:[#allocation5 + $0x18c] sm:$0xf]
    %v1765 = vld [vmem:[#allocation5 + $0x190] sm:$0xf]
    %v1766 = vld [vmem:[#allocation5 + $0x194] sm:$0xf]
    %v1767 = vld [vmem:[#allocation5 + $0x198] sm:$0xf]
    %v1768 = vld [vmem:[#allocation5 + $0x19c] sm:$0xf]
    %v1769 = vld [vmem:[#allocation5 + $0x1a0] sm:$0xf]
    %v1770 = vld [vmem:[#allocation5 + $0x1a4] sm:$0xf]
    %v1771 = vld [vmem:[#allocation5 + $0x1a8] sm:$0xf]
    %v1772 = vld [vmem:[#allocation5 + $0x1ac] sm:$0xf]
    %v1773 = vld [vmem:[#allocation5 + $0x1b0] sm:$0xf]
    %v1774 = vld [vmem:[#allocation5 + $0x1b4] sm:$0xf]
    %v1775 = vld [vmem:[#allocation5 + $0x1b8] sm:$0xf]
    %v1776 = vld [vmem:[#allocation5 + $0x1bc] sm:$0xf]
    %v1777 = vld [vmem:[#allocation5 + $0x1c0] sm:$0xf]
    %v1778 = vld [vmem:[#allocation5 + $0x1c4] sm:$0xf]
    %v1779 = vld [vmem:[#allocation5 + $0x1c8] sm:$0xf]
    %v1780 = vld [vmem:[#allocation5 + $0x1cc] sm:$0xf]
    %v1781 = vld [vmem:[#allocation5 + $0x1d0] sm:$0xf]
    %v1782 = vld [vmem:[#allocation5 + $0x1d4] sm:$0xf]
    %v1783 = vld [vmem:[#allocation5 + $0x1d8] sm:$0xf]
    %v1784 = vld [vmem:[#allocation5 + $0x1dc] sm:$0xf]
    %v1785 = vld [vmem:[#allocation5 + $0x1e0] sm:$0xf]
    %v1786 = vld [vmem:[#allocation5 + $0x1e4] sm:$0xf]
    %v1787 = vld [vmem:[#allocation5 + $0x1e8] sm:$0xf]
    %v1788 = vld [vmem:[#allocation5 + $0x1ec] sm:$0xf]
    %v1789 = vld [vmem:[#allocation5 + $0x1f0] sm:$0xf]
    %v1790 = vld [vmem:[#allocation5 + $0x1f4] sm:$0xf]
    %v1791 = vld [vmem:[#allocation5 + $0x1f8] sm:$0xf]
    %v1792 = vld [vmem:[#allocation5 + $0x1fc] sm:$0xf]
    %v1793 = vld [vmem:[%s2] sm:$0x1]
    %v1795 = vlaneseq
    %v1796 = vshrl.u32 %v1795, 7
    %v1797 = vsub.s32 0, %v1796
    %v1798 = vrot.slane %v1793, %v1797
    %v1928 = vunpack.c.l.b16 %v1665
    %v1929 = vunpack.c.l.b16 %v1666
    %v1930 = vunpack.c.l.b16 %v1667
    %v1931 = vunpack.c.l.b16 %v1668
    %v1932 = vunpack.c.l.b16 %v1669
    %v1933 = vunpack.c.l.b16 %v1670
    %v1934 = vunpack.c.l.b16 %v1671
    %v1935 = vunpack.c.l.b16 %v1672
    %v1936 = vunpack.c.l.b16 %v1673
    %v1937 = vunpack.c.l.b16 %v1674
    %v1938 = vunpack.c.l.b16 %v1675
    %v1939 = vunpack.c.l.b16 %v1676
    %v1940 = vunpack.c.l.b16 %v1677
    %v1941 = vunpack.c.l.b16 %v1678
    %v1942 = vunpack.c.l.b16 %v1679
    %v1943 = vunpack.c.l.b16 %v1680
    %v1944 = vunpack.c.l.b16 %v1681
    %v1945 = vunpack.c.l.b16 %v1682
    %v1946 = vunpack.c.l.b16 %v1683
    %v1947 = vunpack.c.l.b16 %v1684
    %v1948 = vunpack.c.l.b16 %v1685
    %v1949 = vunpack.c.l.b16 %v1686
    %v1950 = vunpack.c.l.b16 %v1687
    %v1951 = vunpack.c.l.b16 %v1688
    %v1952 = vunpack.c.l.b16 %v1689
    %v1953 = vunpack.c.l.b16 %v1690
    %v1954 = vunpack.c.l.b16 %v1691
    %v1955 = vunpack.c.l.b16 %v1692
    %v1956 = vunpack.c.l.b16 %v1693
    %v1957 = vunpack.c.l.b16 %v1694
    %v1958 = vunpack.c.l.b16 %v1695
    %v1959 = vunpack.c.l.b16 %v1696
    %v1960 = vunpack.c.l.b16 %v1697
    %v1961 = vunpack.c.l.b16 %v1698
    %v1962 = vunpack.c.l.b16 %v1699
    %v1963 = vunpack.c.l.b16 %v1700
    %v1964 = vunpack.c.l.b16 %v1701
    %v1965 = vunpack.c.l.b16 %v1702
    %v1966 = vunpack.c.l.b16 %v1703
    %v1967 = vunpack.c.l.b16 %v1704
    %v1968 = vunpack.c.l.b16 %v1705
    %v1969 = vunpack.c.l.b16 %v1706
    %v1970 = vunpack.c.l.b16 %v1707
    %v1971 = vunpack.c.l.b16 %v1708
    %v1972 = vunpack.c.l.b16 %v1709
    %v1973 = vunpack.c.l.b16 %v1710
    %v1974 = vunpack.c.l.b16 %v1711
    %v1975 = vunpack.c.l.b16 %v1712
    %v1976 = vunpack.c.l.b16 %v1713
    %v1977 = vunpack.c.l.b16 %v1714
    %v1978 = vunpack.c.l.b16 %v1715
    %v1979 = vunpack.c.l.b16 %v1716
    %v1980 = vunpack.c.l.b16 %v1717
    %v1981 = vunpack.c.l.b16 %v1718
    %v1982 = vunpack.c.l.b16 %v1719
    %v1983 = vunpack.c.l.b16 %v1720
    %v1984 = vunpack.c.l.b16 %v1721
    %v1985 = vunpack.c.l.b16 %v1722
    %v1986 = vunpack.c.l.b16 %v1723
    %v1987 = vunpack.c.l.b16 %v1724
    %v1988 = vunpack.c.l.b16 %v1725
    %v1989 = vunpack.c.l.b16 %v1726
    %v1990 = vunpack.c.l.b16 %v1727
    %v1991 = vunpack.c.l.b16 %v1728
    %v1992 = vunpack.c.l.b16 %v1729
    %v1993 = vunpack.c.l.b16 %v1730
    %v1994 = vunpack.c.l.b16 %v1731
    %v1995 = vunpack.c.l.b16 %v1732
    %v1996 = vunpack.c.l.b16 %v1733
    %v1997 = vunpack.c.l.b16 %v1734
    %v1998 = vunpack.c.l.b16 %v1735
    %v1999 = vunpack.c.l.b16 %v1736
    %v2000 = vunpack.c.l.b16 %v1737
    %v2001 = vunpack.c.l.b16 %v1738
    %v2002 = vunpack.c.l.b16 %v1739
    %v2003 = vunpack.c.l.b16 %v1740
    %v2004 = vunpack.c.l.b16 %v1741
    %v2005 = vunpack.c.l.b16 %v1742
    %v2006 = vunpack.c.l.b16 %v1743
    %v2007 = vunpack.c.l.b16 %v1744
    %v2008 = vunpack.c.l.b16 %v1745
    %v2009 = vunpack.c.l.b16 %v1746
    %v2010 = vunpack.c.l.b16 %v1747
    %v2011 = vunpack.c.l.b16 %v1748
    %v2012 = vunpack.c.l.b16 %v1749
    %v2013 = vunpack.c.l.b16 %v1750
    %v2014 = vunpack.c.l.b16 %v1751
    %v2015 = vunpack.c.l.b16 %v1752
    %v2016 = vunpack.c.l.b16 %v1753
    %v2017 = vunpack.c.l.b16 %v1754
    %v2018 = vunpack.c.l.b16 %v1755
    %v2019 = vunpack.c.l.b16 %v1756
    %v2020 = vunpack.c.l.b16 %v1757
    %v2021 = vunpack.c.l.b16 %v1758
    %v2022 = vunpack.c.l.b16 %v1759
    %v2023 = vunpack.c.l.b16 %v1760
    %v2024 = vunpack.c.l.b16 %v1761
    %v2025 = vunpack.c.l.b16 %v1762
    %v2026 = vunpack.c.l.b16 %v1763
    %v2027 = vunpack.c.l.b16 %v1764
    %v2028 = vunpack.c.l.b16 %v1765
    %v2029 = vunpack.c.l.b16 %v1766
    %v2030 = vunpack.c.l.b16 %v1767
    %v2031 = vunpack.c.l.b16 %v1768
    %v2032 = vunpack.c.l.b16 %v1769
    %v2033 = vunpack.c.l.b16 %v1770
    %v2034 = vunpack.c.l.b16 %v1771
    %v2035 = vunpack.c.l.b16 %v1772
    %v2036 = vunpack.c.l.b16 %v1773
    %v2037 = vunpack.c.l.b16 %v1774
    %v2038 = vunpack.c.l.b16 %v1775
    %v2039 = vunpack.c.l.b16 %v1776
    %v2040 = vunpack.c.l.b16 %v1777
    %v2041 = vunpack.c.l.b16 %v1778
    %v2042 = vunpack.c.l.b16 %v1779
    %v2043 = vunpack.c.l.b16 %v1780
    %v2044 = vunpack.c.l.b16 %v1781
    %v2045 = vunpack.c.l.b16 %v1782
    %v2046 = vunpack.c.l.b16 %v1783
    %v2047 = vunpack.c.l.b16 %v1784
    %v2048 = vunpack.c.l.b16 %v1785
    %v2049 = vunpack.c.l.b16 %v1786
    %v2050 = vunpack.c.l.b16 %v1787
    %v2051 = vunpack.c.l.b16 %v1788
    %v2052 = vunpack.c.l.b16 %v1789
    %v2053 = vunpack.c.l.b16 %v1790
    %v2054 = vunpack.c.l.b16 %v1791
    %v2055 = vunpack.c.l.b16 %v1792
    %v2056 = vpack.c.b16 %v1929, %v1928
    %v2057 = vpack.c.b16 %v1931, %v1930
    %v2058 = vpack.c.b16 %v1933, %v1932
    %v2059 = vpack.c.b16 %v1935, %v1934
    %v2060 = vpack.c.b16 %v1937, %v1936
    %v2061 = vpack.c.b16 %v1939, %v1938
    %v2062 = vpack.c.b16 %v1941, %v1940
    %v2063 = vpack.c.b16 %v1943, %v1942
    %v2064 = vpack.c.b16 %v1945, %v1944
    %v2065 = vpack.c.b16 %v1947, %v1946
    %v2066 = vpack.c.b16 %v1949, %v1948
    %v2067 = vpack.c.b16 %v1951, %v1950
    %v2068 = vpack.c.b16 %v1953, %v1952
    %v2069 = vpack.c.b16 %v1955, %v1954
    %v2070 = vpack.c.b16 %v1957, %v1956
    %v2071 = vpack.c.b16 %v1959, %v1958
    %v2072 = vpack.c.b16 %v1961, %v1960
    %v2073 = vpack.c.b16 %v1963, %v1962
    %v2074 = vpack.c.b16 %v1965, %v1964
    %v2075 = vpack.c.b16 %v1967, %v1966
    %v2076 = vpack.c.b16 %v1969, %v1968
    %v2077 = vpack.c.b16 %v1971, %v1970
    %v2078 = vpack.c.b16 %v1973, %v1972
    %v2079 = vpack.c.b16 %v1975, %v1974
    %v2080 = vpack.c.b16 %v1977, %v1976
    %v2081 = vpack.c.b16 %v1979, %v1978
    %v2082 = vpack.c.b16 %v1981, %v1980
    %v2083 = vpack.c.b16 %v1983, %v1982
    %v2084 = vpack.c.b16 %v1985, %v1984
    %v2085 = vpack.c.b16 %v1987, %v1986
    %v2086 = vpack.c.b16 %v1989, %v1988
    %v2087 = vpack.c.b16 %v1991, %v1990
    %v2088 = vpack.c.b16 %v1993, %v1992
    %v2089 = vpack.c.b16 %v1995, %v1994
    %v2090 = vpack.c.b16 %v1997, %v1996
    %v2091 = vpack.c.b16 %v1999, %v1998
    %v2092 = vpack.c.b16 %v2001, %v2000
    %v2093 = vpack.c.b16 %v2003, %v2002
    %v2094 = vpack.c.b16 %v2005, %v2004
    %v2095 = vpack.c.b16 %v2007, %v2006
    %v2096 = vpack.c.b16 %v2009, %v2008
    %v2097 = vpack.c.b16 %v2011, %v2010
    %v2098 = vpack.c.b16 %v2013, %v2012
    %v2099 = vpack.c.b16 %v2015, %v2014
    %v2100 = vpack.c.b16 %v2017, %v2016
    %v2101 = vpack.c.b16 %v2019, %v2018
    %v2102 = vpack.c.b16 %v2021, %v2020
    %v2103 = vpack.c.b16 %v2023, %v2022
    %v2104 = vpack.c.b16 %v2025, %v2024
    %v2105 = vpack.c.b16 %v2027, %v2026
    %v2106 = vpack.c.b16 %v2029, %v2028
    %v2107 = vpack.c.b16 %v2031, %v2030
    %v2108 = vpack.c.b16 %v2033, %v2032
    %v2109 = vpack.c.b16 %v2035, %v2034
    %v2110 = vpack.c.b16 %v2037, %v2036
    %v2111 = vpack.c.b16 %v2039, %v2038
    %v2112 = vpack.c.b16 %v2041, %v2040
    %v2113 = vpack.c.b16 %v2043, %v2042
    %v2114 = vpack.c.b16 %v2045, %v2044
    %v2115 = vpack.c.b16 %v2047, %v2046
    %v2116 = vpack.c.b16 %v2049, %v2048
    %v2117 = vpack.c.b16 %v2051, %v2050
    %v2118 = vpack.c.b16 %v2053, %v2052
    %v2119 = vpack.c.b16 %v2055, %v2054
    %2184 = vmatprep.subr.bf16.mxu0 0
    %2185 = vmatpush1.bf16.msra.mxu0 %v2063
    %2186 = vmatprep.subr.bf16.mxu0 0
    %2187 = vmatpush1.bf16.msra.mxu0 %v2062
    %2188 = vmatprep.subr.bf16.mxu0 0
    %2189 = vmatpush1.bf16.msra.mxu0 %v2061
    %2190 = vmatprep.subr.bf16.mxu0 0
    %2191 = vmatpush1.bf16.msra.mxu0 %v2060
    %2192 = vmatprep.subr.bf16.mxu0 0
    %2193 = vmatpush1.bf16.msra.mxu0 %v2059
    %2194 = vmatprep.subr.bf16.mxu0 0
    %2195 = vmatpush1.bf16.msra.mxu0 %v2058
    %2196 = vmatprep.subr.bf16.mxu0 0
    %2197 = vmatpush1.bf16.msra.mxu0 %v2057
    %2198 = vmatprep.subr.bf16.mxu0 0
    %2199 = vmatpush1.bf16.msra.mxu0 %v2056
    %2200 = vmatprep.subr.bf16.mxu0 0
    %2201 = vmatpush2.bf16.msra.mxu0 %v2071
    %2202 = vmatprep.subr.bf16.mxu0 0
    %2203 = vmatpush2.bf16.msra.mxu0 %v2070
    %2204 = vmatprep.subr.bf16.mxu0 0
    %2205 = vmatpush2.bf16.msra.mxu0 %v2069
    %2206 = vmatprep.subr.bf16.mxu0 0
    %2207 = vmatpush2.bf16.msra.mxu0 %v2068
    %2208 = vmatprep.subr.bf16.mxu0 0
    %2209 = vmatpush2.bf16.msra.mxu0 %v2067
    %2210 = vmatprep.subr.bf16.mxu0 0
    %2211 = vmatpush2.bf16.msra.mxu0 %v2066
    %2212 = vmatprep.subr.bf16.mxu0 0
    %2213 = vmatpush2.bf16.msra.mxu0 %v2065
    %2214 = vmatprep.subr.bf16.mxu0 0
    %2215 = vmatpush2.bf16.msra.mxu0 %v2064
    %2216 = vmatprep.mubr.bf16.mxu0 %v1602
    %2217 = vmatmul.mubr.bf16.gmra.mxu0 %v1601
    %v2218 = vpop.f32.mrf.mxu0
    %v2219 = vadd.f32 %v1798, %v2218
    %v2220 = vpop.f32.mrf.mxu0
    %v2221 = vpop.f32.mrf.mxu0
    %v2222 = vadd.f32 %v1798, %v2221
    %v2223 = vpop.f32.mrf.mxu0
    %2224 = vmatprep.mubr.bf16.mxu0 %v1610
    %2225 = vmatmul.mubr.bf16.gmra.mxu0 %v1609
    %v2226 = vpop.f32.mrf.mxu0
    %v2227 = vadd.f32 %v1798, %v2226
    %v2228 = vpop.f32.mrf.mxu0
    %v2229 = vpop.f32.mrf.mxu0
    %v2230 = vadd.f32 %v1798, %v2229
    %v2231 = vpop.f32.mrf.mxu0
    %2232 = vmatprep.mubr.bf16.mxu0 %v1618
    %2233 = vmatmul.mubr.bf16.gmra.mxu0 %v1617
    %v2234 = vpop.f32.mrf.mxu0
    %v2235 = vadd.f32 %v1798, %v2234
    %v2236 = vpop.f32.mrf.mxu0
    %v2237 = vpop.f32.mrf.mxu0
    %v2238 = vadd.f32 %v1798, %v2237
    %v2239 = vpop.f32.mrf.mxu0
    %2240 = vmatprep.mubr.bf16.mxu0 %v1626
    %2241 = vmatmul.mubr.bf16.gmra.mxu0 %v1625
    %v2242 = vpop.f32.mrf.mxu0
    %v2243 = vadd.f32 %v1798, %v2242
    %v2244 = vpop.f32.mrf.mxu0
    %v2245 = vpop.f32.mrf.mxu0
    %v2246 = vadd.f32 %v1798, %v2245
    %v2247 = vpop.f32.mrf.mxu0
    %2248 = vmatprep.mubr.bf16.mxu0 %v1634
    %2249 = vmatmul.mubr.bf16.gmra.mxu0 %v1633
    %v2250 = vpop.f32.mrf.mxu0
    %v2251 = vadd.f32 %v1798, %v2250
    %v2252 = vpop.f32.mrf.mxu0
    %v2253 = vpop.f32.mrf.mxu0
    %v2254 = vadd.f32 %v1798, %v2253
    %v2255 = vpop.f32.mrf.mxu0
    %2256 = vmatprep.mubr.bf16.mxu0 %v1642
    %2257 = vmatmul.mubr.bf16.gmra.mxu0 %v1641
    %v2258 = vpop.f32.mrf.mxu0
    %v2259 = vadd.f32 %v1798, %v2258
    %v2260 = vpop.f32.mrf.mxu0
    %v2261 = vpop.f32.mrf.mxu0
    %v2262 = vadd.f32 %v1798, %v2261
    %v2263 = vpop.f32.mrf.mxu0
    %2264 = vmatprep.mubr.bf16.mxu0 %v1650
    %2265 = vmatmul.mubr.bf16.gmra.mxu0 %v1649
    %v2266 = vpop.f32.mrf.mxu0
    %v2267 = vadd.f32 %v1798, %v2266
    %v2268 = vpop.f32.mrf.mxu0
    %v2269 = vpop.f32.mrf.mxu0
    %v2270 = vadd.f32 %v1798, %v2269
    %v2271 = vpop.f32.mrf.mxu0
    %2272 = vmatprep.mubr.bf16.mxu0 %v1658
    %2273 = vmatmul.mubr.bf16.gmra.mxu0 %v1657
    %v2274 = vpop.f32.mrf.mxu0
    %v2275 = vadd.f32 %v1798, %v2274
    %v2276 = vpop.f32.mrf.mxu0
    %v2277 = vpop.f32.mrf.mxu0
    %v2278 = vadd.f32 %v1798, %v2277
    %v2279 = vpop.f32.mrf.mxu0
    %2280 = vdwg.mxu0
    %2281 = vmatprep.subr.bf16.mxu0 0
    %2282 = vmatpush1.bf16.msra.mxu0 %v2079
    %2283 = vmatprep.subr.bf16.mxu0 0
    %2284 = vmatpush1.bf16.msra.mxu0 %v2078
    %2285 = vmatprep.subr.bf16.mxu0 0
    %2286 = vmatpush1.bf16.msra.mxu0 %v2077
    %2287 = vmatprep.subr.bf16.mxu0 0
    %2288 = vmatpush1.bf16.msra.mxu0 %v2076
    %2289 = vmatprep.subr.bf16.mxu0 0
    %2290 = vmatpush1.bf16.msra.mxu0 %v2075
    %2291 = vmatprep.subr.bf16.mxu0 0
    %2292 = vmatpush1.bf16.msra.mxu0 %v2074
    %2293 = vmatprep.subr.bf16.mxu0 0
    %2294 = vmatpush1.bf16.msra.mxu0 %v2073
    %2295 = vmatprep.subr.bf16.mxu0 0
    %2296 = vmatpush1.bf16.msra.mxu0 %v2072
    %2297 = vmatprep.subr.bf16.mxu0 0
    %2298 = vmatpush2.bf16.msra.mxu0 %v2087
    %2299 = vmatprep.subr.bf16.mxu0 0
    %2300 = vmatpush2.bf16.msra.mxu0 %v2086
    %2301 = vmatprep.subr.bf16.mxu0 0
    %2302 = vmatpush2.bf16.msra.mxu0 %v2085
    %2303 = vmatprep.subr.bf16.mxu0 0
    %2304 = vmatpush2.bf16.msra.mxu0 %v2084
    %2305 = vmatprep.subr.bf16.mxu0 0
    %2306 = vmatpush2.bf16.msra.mxu0 %v2083
    %2307 = vmatprep.subr.bf16.mxu0 0
    %2308 = vmatpush2.bf16.msra.mxu0 %v2082
    %2309 = vmatprep.subr.bf16.mxu0 0
    %2310 = vmatpush2.bf16.msra.mxu0 %v2081
    %2311 = vmatprep.subr.bf16.mxu0 0
    %2312 = vmatpush2.bf16.msra.mxu0 %v2080
    %2313 = vmatprep.mubr.bf16.mxu0 %v1604
    %2314 = vmatmul.mubr.bf16.gmra.mxu0 %v1603
    %v2315 = vpop.f32.mrf.mxu0
    %v2316 = vadd.f32 %v2219, %v2315
    %v2317 = vpop.f32.mrf.mxu0
    %v2318 = vpop.f32.mrf.mxu0
    %v2319 = vadd.f32 %v2222, %v2318
    %v2320 = vpop.f32.mrf.mxu0
    %2321 = vmatprep.mubr.bf16.mxu0 %v1612
    %2322 = vmatmul.mubr.bf16.gmra.mxu0 %v1611
    %v2323 = vpop.f32.mrf.mxu0
    %v2324 = vadd.f32 %v2227, %v2323
    %v2325 = vpop.f32.mrf.mxu0
    %v2326 = vpop.f32.mrf.mxu0
    %v2327 = vadd.f32 %v2230, %v2326
    %v2328 = vpop.f32.mrf.mxu0
    %2329 = vmatprep.mubr.bf16.mxu0 %v1620
    %2330 = vmatmul.mubr.bf16.gmra.mxu0 %v1619
    %v2331 = vpop.f32.mrf.mxu0
    %v2332 = vadd.f32 %v2235, %v2331
    %v2333 = vpop.f32.mrf.mxu0
    %v2334 = vpop.f32.mrf.mxu0
    %v2335 = vadd.f32 %v2238, %v2334
    %v2336 = vpop.f32.mrf.mxu0
    %2337 = vmatprep.mubr.bf16.mxu0 %v1628
    %2338 = vmatmul.mubr.bf16.gmra.mxu0 %v1627
    %v2339 = vpop.f32.mrf.mxu0
    %v2340 = vadd.f32 %v2243, %v2339
    %v2341 = vpop.f32.mrf.mxu0
    %v2342 = vpop.f32.mrf.mxu0
    %v2343 = vadd.f32 %v2246, %v2342
    %v2344 = vpop.f32.mrf.mxu0
    %2345 = vmatprep.mubr.bf16.mxu0 %v1636
    %2346 = vmatmul.mubr.bf16.gmra.mxu0 %v1635
    %v2347 = vpop.f32.mrf.mxu0
    %v2348 = vadd.f32 %v2251, %v2347
    %v2349 = vpop.f32.mrf.mxu0
    %v2350 = vpop.f32.mrf.mxu0
    %v2351 = vadd.f32 %v2254, %v2350
    %v2352 = vpop.f32.mrf.mxu0
    %2353 = vmatprep.mubr.bf16.mxu0 %v1644
    %2354 = vmatmul.mubr.bf16.gmra.mxu0 %v1643
    %v2355 = vpop.f32.mrf.mxu0
    %v2356 = vadd.f32 %v2259, %v2355
    %v2357 = vpop.f32.mrf.mxu0
    %v2358 = vpop.f32.mrf.mxu0
    %v2359 = vadd.f32 %v2262, %v2358
    %v2360 = vpop.f32.mrf.mxu0
    %2361 = vmatprep.mubr.bf16.mxu0 %v1652
    %2362 = vmatmul.mubr.bf16.gmra.mxu0 %v1651
    %v2363 = vpop.f32.mrf.mxu0
    %v2364 = vadd.f32 %v2267, %v2363
    %v2365 = vpop.f32.mrf.mxu0
    %v2366 = vpop.f32.mrf.mxu0
    %v2367 = vadd.f32 %v2270, %v2366
    %v2368 = vpop.f32.mrf.mxu0
    %2369 = vmatprep.mubr.bf16.mxu0 %v1660
    %2370 = vmatmul.mubr.bf16.gmra.mxu0 %v1659
    %v2371 = vpop.f32.mrf.mxu0
    %v2372 = vadd.f32 %v2275, %v2371
    %v2373 = vpop.f32.mrf.mxu0
    %v2374 = vpop.f32.mrf.mxu0
    %v2375 = vadd.f32 %v2278, %v2374
    %v2376 = vpop.f32.mrf.mxu0
    %2377 = vdwg.mxu0
    %2378 = vmatprep.subr.bf16.mxu0 0
    %2379 = vmatpush1.bf16.msra.mxu0 %v2095
    %2380 = vmatprep.subr.bf16.mxu0 0
    %2381 = vmatpush1.bf16.msra.mxu0 %v2094
    %2382 = vmatprep.subr.bf16.mxu0 0
    %2383 = vmatpush1.bf16.msra.mxu0 %v2093
    %2384 = vmatprep.subr.bf16.mxu0 0
    %2385 = vmatpush1.bf16.msra.mxu0 %v2092
    %2386 = vmatprep.subr.bf16.mxu0 0
    %2387 = vmatpush1.bf16.msra.mxu0 %v2091
    %2388 = vmatprep.subr.bf16.mxu0 0
    %2389 = vmatpush1.bf16.msra.mxu0 %v2090
    %2390 = vmatprep.subr.bf16.mxu0 0
    %2391 = vmatpush1.bf16.msra.mxu0 %v2089
    %2392 = vmatprep.subr.bf16.mxu0 0
    %2393 = vmatpush1.bf16.msra.mxu0 %v2088
    %2394 = vmatprep.subr.bf16.mxu0 0
    %2395 = vmatpush2.bf16.msra.mxu0 %v2103
    %2396 = vmatprep.subr.bf16.mxu0 0
    %2397 = vmatpush2.bf16.msra.mxu0 %v2102
    %2398 = vmatprep.subr.bf16.mxu0 0
    %2399 = vmatpush2.bf16.msra.mxu0 %v2101
    %2400 = vmatprep.subr.bf16.mxu0 0
    %2401 = vmatpush2.bf16.msra.mxu0 %v2100
    %2402 = vmatprep.subr.bf16.mxu0 0
    %2403 = vmatpush2.bf16.msra.mxu0 %v2099
    %2404 = vmatprep.subr.bf16.mxu0 0
    %2405 = vmatpush2.bf16.msra.mxu0 %v2098
    %2406 = vmatprep.subr.bf16.mxu0 0
    %2407 = vmatpush2.bf16.msra.mxu0 %v2097
    %2408 = vmatprep.subr.bf16.mxu0 0
    %2409 = vmatpush2.bf16.msra.mxu0 %v2096
    %2410 = vmatprep.mubr.bf16.mxu0 %v1606
    %2411 = vmatmul.mubr.bf16.gmra.mxu0 %v1605
    %v2412 = vpop.f32.mrf.mxu0
    %v2413 = vadd.f32 %v2316, %v2412
    %v2414 = vpop.f32.mrf.mxu0
    %v2415 = vpop.f32.mrf.mxu0
    %v2416 = vadd.f32 %v2319, %v2415
    %v2417 = vpop.f32.mrf.mxu0
    %2418 = vmatprep.mubr.bf16.mxu0 %v1614
    %2419 = vmatmul.mubr.bf16.gmra.mxu0 %v1613
    %v2420 = vpop.f32.mrf.mxu0
    %v2421 = vadd.f32 %v2324, %v2420
    %v2422 = vpop.f32.mrf.mxu0
    %v2423 = vpop.f32.mrf.mxu0
    %v2424 = vadd.f32 %v2327, %v2423
    %v2425 = vpop.f32.mrf.mxu0
    %2426 = vmatprep.mubr.bf16.mxu0 %v1622
    %2427 = vmatmul.mubr.bf16.gmra.mxu0 %v1621
    %v2428 = vpop.f32.mrf.mxu0
    %v2429 = vadd.f32 %v2332, %v2428
    %v2430 = vpop.f32.mrf.mxu0
    %v2431 = vpop.f32.mrf.mxu0
    %v2432 = vadd.f32 %v2335, %v2431
    %v2433 = vpop.f32.mrf.mxu0
    %2434 = vmatprep.mubr.bf16.mxu0 %v1630
    %2435 = vmatmul.mubr.bf16.gmra.mxu0 %v1629
    %v2436 = vpop.f32.mrf.mxu0
    %v2437 = vadd.f32 %v2340, %v2436
    %v2438 = vpop.f32.mrf.mxu0
    %v2439 = vpop.f32.mrf.mxu0
    %v2440 = vadd.f32 %v2343, %v2439
    %v2441 = vpop.f32.mrf.mxu0
    %2442 = vmatprep.mubr.bf16.mxu0 %v1638
    %2443 = vmatmul.mubr.bf16.gmra.mxu0 %v1637
    %v2444 = vpop.f32.mrf.mxu0
    %v2445 = vadd.f32 %v2348, %v2444
    %v2446 = vpop.f32.mrf.mxu0
    %v2447 = vpop.f32.mrf.mxu0
    %v2448 = vadd.f32 %v2351, %v2447
    %v2449 = vpop.f32.mrf.mxu0
    %2450 = vmatprep.mubr.bf16.mxu0 %v1646
    %2451 = vmatmul.mubr.bf16.gmra.mxu0 %v1645
    %v2452 = vpop.f32.mrf.mxu0
    %v2453 = vadd.f32 %v2356, %v2452
    %v2454 = vpop.f32.mrf.mxu0
    %v2455 = vpop.f32.mrf.mxu0
    %v2456 = vadd.f32 %v2359, %v2455
    %v2457 = vpop.f32.mrf.mxu0
    %2458 = vmatprep.mubr.bf16.mxu0 %v1654
    %2459 = vmatmul.mubr.bf16.gmra.mxu0 %v1653
    %v2460 = vpop.f32.mrf.mxu0
    %v2461 = vadd.f32 %v2364, %v2460
    %v2462 = vpop.f32.mrf.mxu0
    %v2463 = vpop.f32.mrf.mxu0
    %v2464 = vadd.f32 %v2367, %v2463
    %v2465 = vpop.f32.mrf.mxu0
    %2466 = vmatprep.mubr.bf16.mxu0 %v1662
    %2467 = vmatmul.mubr.bf16.gmra.mxu0 %v1661
    %v2468 = vpop.f32.mrf.mxu0
    %v2469 = vadd.f32 %v2372, %v2468
    %v2470 = vpop.f32.mrf.mxu0
    %v2471 = vpop.f32.mrf.mxu0
    %v2472 = vadd.f32 %v2375, %v2471
    %v2473 = vpop.f32.mrf.mxu0
    %2474 = vdwg.mxu0
    %2475 = vmatprep.subr.bf16.mxu0 0
    %2476 = vmatpush1.bf16.msra.mxu0 %v2111
    %2477 = vmatprep.subr.bf16.mxu0 0
    %2478 = vmatpush1.bf16.msra.mxu0 %v2110
    %2479 = vmatprep.subr.bf16.mxu0 0
    %2480 = vmatpush1.bf16.msra.mxu0 %v2109
    %2481 = vmatprep.subr.bf16.mxu0 0
    %2482 = vmatpush1.bf16.msra.mxu0 %v2108
    %2483 = vmatprep.subr.bf16.mxu0 0
    %2484 = vmatpush1.bf16.msra.mxu0 %v2107
    %2485 = vmatprep.subr.bf16.mxu0 0
    %2486 = vmatpush1.bf16.msra.mxu0 %v2106
    %2487 = vmatprep.subr.bf16.mxu0 0
    %2488 = vmatpush1.bf16.msra.mxu0 %v2105
    %2489 = vmatprep.subr.bf16.mxu0 0
    %2490 = vmatpush1.bf16.msra.mxu0 %v2104
    %2491 = vmatprep.subr.bf16.mxu0 0
    %2492 = vmatpush2.bf16.msra.mxu0 %v2119
    %2493 = vmatprep.subr.bf16.mxu0 0
    %2494 = vmatpush2.bf16.msra.mxu0 %v2118
    %2495 = vmatprep.subr.bf16.mxu0 0
    %2496 = vmatpush2.bf16.msra.mxu0 %v2117
    %2497 = vmatprep.subr.bf16.mxu0 0
    %2498 = vmatpush2.bf16.msra.mxu0 %v2116
    %2499 = vmatprep.subr.bf16.mxu0 0
    %2500 = vmatpush2.bf16.msra.mxu0 %v2115
    %2501 = vmatprep.subr.bf16.mxu0 0
    %2502 = vmatpush2.bf16.msra.mxu0 %v2114
    %2503 = vmatprep.subr.bf16.mxu0 0
    %2504 = vmatpush2.bf16.msra.mxu0 %v2113
    %2505 = vmatprep.subr.bf16.mxu0 0
    %2506 = vmatpush2.bf16.msra.mxu0 %v2112
    %2507 = vmatprep.mubr.bf16.mxu0 %v1608
    %2508 = vmatmul.mubr.bf16.gmra.mxu0 %v1607
    %v2509 = vpop.f32.mrf.mxu0
    %v2510 = vadd.f32 %v2413, %v2509
    %v2511 = vpop.f32.mrf.mxu0
    %v2512 = vpop.f32.mrf.mxu0
    %v2513 = vadd.f32 %v2416, %v2512
    %v2514 = vpop.f32.mrf.mxu0
    %2515 = vmatprep.mubr.bf16.mxu0 %v1616
    %2516 = vmatmul.mubr.bf16.gmra.mxu0 %v1615
    %v2517 = vpop.f32.mrf.mxu0
    %v2518 = vadd.f32 %v2421, %v2517
    %v2519 = vpop.f32.mrf.mxu0
    %v2520 = vpop.f32.mrf.mxu0
    %v2521 = vadd.f32 %v2424, %v2520
    %v2522 = vpop.f32.mrf.mxu0
    %2523 = vmatprep.mubr.bf16.mxu0 %v1624
    %2524 = vmatmul.mubr.bf16.gmra.mxu0 %v1623
    %v2525 = vpop.f32.mrf.mxu0
    %v2526 = vadd.f32 %v2429, %v2525
    %v2527 = vpop.f32.mrf.mxu0
    %v2528 = vpop.f32.mrf.mxu0
    %v2529 = vadd.f32 %v2432, %v2528
    %v2530 = vpop.f32.mrf.mxu0
    %2531 = vmatprep.mubr.bf16.mxu0 %v1632
    %2532 = vmatmul.mubr.bf16.gmra.mxu0 %v1631
    %v2533 = vpop.f32.mrf.mxu0
    %v2534 = vadd.f32 %v2437, %v2533
    %v2535 = vpop.f32.mrf.mxu0
    %v2536 = vpop.f32.mrf.mxu0
    %v2537 = vadd.f32 %v2440, %v2536
    %v2538 = vpop.f32.mrf.mxu0
    %2539 = vmatprep.mubr.bf16.mxu0 %v1640
    %2540 = vmatmul.mubr.bf16.gmra.mxu0 %v1639
    %v2541 = vpop.f32.mrf.mxu0
    %v2542 = vadd.f32 %v2445, %v2541
    %v2543 = vpop.f32.mrf.mxu0
    %v2544 = vpop.f32.mrf.mxu0
    %v2545 = vadd.f32 %v2448, %v2544
    %v2546 = vpop.f32.mrf.mxu0
    %2547 = vmatprep.mubr.bf16.mxu0 %v1648
    %2548 = vmatmul.mubr.bf16.gmra.mxu0 %v1647
    %v2549 = vpop.f32.mrf.mxu0
    %v2550 = vadd.f32 %v2453, %v2549
    %v2551 = vpop.f32.mrf.mxu0
    %v2552 = vpop.f32.mrf.mxu0
    %v2553 = vadd.f32 %v2456, %v2552
    %v2554 = vpop.f32.mrf.mxu0
    %2555 = vmatprep.mubr.bf16.mxu0 %v1656
    %2556 = vmatmul.mubr.bf16.gmra.mxu0 %v1655
    %v2557 = vpop.f32.mrf.mxu0
    %v2558 = vadd.f32 %v2461, %v2557
    %v2559 = vpop.f32.mrf.mxu0
    %v2560 = vpop.f32.mrf.mxu0
    %v2561 = vadd.f32 %v2464, %v2560
    %v2562 = vpop.f32.mrf.mxu0
    %2563 = vmatprep.mubr.bf16.mxu0 %v1664
    %2564 = vmatmul.mubr.bf16.gmra.mxu0 %v1663
    %v2565 = vpop.f32.mrf.mxu0
    %v2566 = vadd.f32 %v2469, %v2565
    %v2567 = vpop.f32.mrf.mxu0
    %v2568 = vpop.f32.mrf.mxu0
    %v2569 = vadd.f32 %v2472, %v2568
    %v2570 = vpop.f32.mrf.mxu0
    %2571 = vdwg.mxu0
    %v2572 = vmax.f32 %v2510, 0.0
    %v2573 = vmax.f32 %v2513, 0.0
    %v2574 = vmax.f32 %v2518, 0.0
    %v2575 = vmax.f32 %v2521, 0.0
    %v2576 = vmax.f32 %v2526, 0.0
    %v2577 = vmax.f32 %v2529, 0.0
    %v2578 = vmax.f32 %v2534, 0.0
    %v2579 = vmax.f32 %v2537, 0.0
    %v2580 = vmax.f32 %v2542, 0.0
    %v2581 = vmax.f32 %v2545, 0.0
    %v2582 = vmax.f32 %v2550, 0.0
    %v2583 = vmax.f32 %v2553, 0.0
    %v2584 = vmax.f32 %v2558, 0.0
    %v2585 = vmax.f32 %v2561, 0.0
    %v2586 = vmax.f32 %v2566, 0.0
    %v2587 = vmax.f32 %v2569, 0.0
    %v2588 = vpack.c.bf16 %v2573, %v2572
    %v2589 = vpack.c.bf16 %v2575, %v2574
    %v2590 = vpack.c.bf16 %v2577, %v2576
    %v2591 = vpack.c.bf16 %v2579, %v2578
    %v2592 = vpack.c.bf16 %v2581, %v2580
    %v2593 = vpack.c.bf16 %v2583, %v2582
    %v2594 = vpack.c.bf16 %v2585, %v2584
    %v2595 = vpack.c.bf16 %v2587, %v2586
    %v2596 = vld [vmem:[#allocation7] sm:$0xf]
    %v2597 = vld [vmem:[#allocation7 + $0x4] sm:$0xf]
    %v2598 = vld [vmem:[#allocation7 + $0x8] sm:$0xf]
    %v2599 = vld [vmem:[#allocation7 + $0xc] sm:$0xf]
    %v2600 = vld [vmem:[#allocation7 + $0x10] sm:$0xf]
    %v2601 = vld [vmem:[#allocation7 + $0x14] sm:$0xf]
    %v2602 = vld [vmem:[#allocation7 + $0x18] sm:$0xf]
    %v2603 = vld [vmem:[#allocation7 + $0x1c] sm:$0xf]
    %v2604 = vld [vmem:[#allocation7 + $0x20] sm:$0xf]
    %v2605 = vld [vmem:[#allocation7 + $0x24] sm:$0xf]
    %v2606 = vld [vmem:[#allocation7 + $0x28] sm:$0xf]
    %v2607 = vld [vmem:[#allocation7 + $0x2c] sm:$0xf]
    %v2608 = vld [vmem:[#allocation7 + $0x30] sm:$0xf]
    %v2609 = vld [vmem:[#allocation7 + $0x34] sm:$0xf]
    %v2610 = vld [vmem:[#allocation7 + $0x38] sm:$0xf]
    %v2611 = vld [vmem:[#allocation7 + $0x3c] sm:$0xf]
    %v2612 = vld [vmem:[%s4] sm:$0x1]
    %v2614 = vlaneseq
    %v2615 = vshrl.u32 %v2614, 7
    %v2616 = vsub.s32 0, %v2615
    %v2617 = vrot.slane %v2612, %v2616
    %v2635 = vunpack.c.l.b16 %v2596
    %v2636 = vunpack.c.l.b16 %v2597
    %v2637 = vunpack.c.l.b16 %v2598
    %v2638 = vunpack.c.l.b16 %v2599
    %v2639 = vunpack.c.l.b16 %v2600
    %v2640 = vunpack.c.l.b16 %v2601
    %v2641 = vunpack.c.l.b16 %v2602
    %v2642 = vunpack.c.l.b16 %v2603
    %v2643 = vunpack.c.l.b16 %v2604
    %v2644 = vunpack.c.l.b16 %v2605
    %v2645 = vunpack.c.l.b16 %v2606
    %v2646 = vunpack.c.l.b16 %v2607
    %v2647 = vunpack.c.l.b16 %v2608
    %v2648 = vunpack.c.l.b16 %v2609
    %v2649 = vunpack.c.l.b16 %v2610
    %v2650 = vunpack.c.l.b16 %v2611
    %v2651 = vpack.c.b16 %v2636, %v2635
    %v2652 = vpack.c.b16 %v2638, %v2637
    %v2653 = vpack.c.b16 %v2640, %v2639
    %v2654 = vpack.c.b16 %v2642, %v2641
    %v2655 = vpack.c.b16 %v2644, %v2643
    %v2656 = vpack.c.b16 %v2646, %v2645
    %v2657 = vpack.c.b16 %v2648, %v2647
    %v2658 = vpack.c.b16 %v2650, %v2649
    %2667 = vmatprep.subr.bf16.mxu0 0
    %2668 = vmatpush1.bf16.msra.mxu0 %v2658
    %2669 = vmatprep.subr.bf16.mxu0 0
    %2670 = vmatpush1.bf16.msra.mxu0 %v2657
    %2671 = vmatprep.subr.bf16.mxu0 0
    %2672 = vmatpush1.bf16.msra.mxu0 %v2656
    %2673 = vmatprep.subr.bf16.mxu0 0
    %2674 = vmatpush1.bf16.msra.mxu0 %v2655
    %2675 = vmatprep.subr.bf16.mxu0 0
    %2676 = vmatpush1.bf16.msra.mxu0 %v2654
    %2677 = vmatprep.subr.bf16.mxu0 0
    %2678 = vmatpush1.bf16.msra.mxu0 %v2653
    %2679 = vmatprep.subr.bf16.mxu0 0
    %2680 = vmatpush1.bf16.msra.mxu0 %v2652
    %2681 = vmatprep.subr.bf16.mxu0 0
    %2682 = vmatpush1.bf16.msra.mxu0 %v2651
    %2683 = vmatprep.subr.bf16.mxu0 0
    %2684 = vmatpush2.bf16.msra.mxu0 0
    %2685 = vmatprep.subr.bf16.mxu0 0
    %2686 = vmatpush2.bf16.msra.mxu0 0
    %2687 = vmatprep.subr.bf16.mxu0 0
    %2688 = vmatpush2.bf16.msra.mxu0 0
    %2689 = vmatprep.subr.bf16.mxu0 0
    %2690 = vmatpush2.bf16.msra.mxu0 0
    %2691 = vmatprep.subr.bf16.mxu0 0
    %2692 = vmatpush2.bf16.msra.mxu0 0
    %2693 = vmatprep.subr.bf16.mxu0 0
    %2694 = vmatpush2.bf16.msra.mxu0 0
    %2695 = vmatprep.subr.bf16.mxu0 0
    %2696 = vmatpush2.bf16.msra.mxu0 0
    %2697 = vmatprep.subr.bf16.mxu0 0
    %2698 = vmatpush2.bf16.msra.mxu0 0
    %2699 = vmatprep.mubr.bf16.mxu0 0
    %2700 = vmatmul.mubr.bf16.gmra.mxu0 %v2588
    %v2701 = vpop.f32.mrf.mxu0
    %v2702 = vadd.f32 %v2617, %v2701
    %v2703 = vpop.f32.mrf.mxu0
    %v2704 = vpop.f32.mrf.mxu0
    %v2705 = vadd.f32 %v2617, %v2704
    %v2706 = vpop.f32.mrf.mxu0
    %2707 = vmatprep.mubr.bf16.mxu0 0
    %2708 = vmatmul.mubr.bf16.gmra.mxu0 %v2589
    %v2709 = vpop.f32.mrf.mxu0
    %v2710 = vadd.f32 %v2617, %v2709
    %v2711 = vpop.f32.mrf.mxu0
    %v2712 = vpop.f32.mrf.mxu0
    %v2713 = vadd.f32 %v2617, %v2712
    %v2714 = vpop.f32.mrf.mxu0
    %2715 = vmatprep.mubr.bf16.mxu0 0
    %2716 = vmatmul.mubr.bf16.gmra.mxu0 %v2590
    %v2717 = vpop.f32.mrf.mxu0
    %v2718 = vadd.f32 %v2617, %v2717
    %v2719 = vpop.f32.mrf.mxu0
    %v2720 = vpop.f32.mrf.mxu0
    %v2721 = vadd.f32 %v2617, %v2720
    %v2722 = vpop.f32.mrf.mxu0
    %2723 = vmatprep.mubr.bf16.mxu0 0
    %2724 = vmatmul.mubr.bf16.gmra.mxu0 %v2591
    %v2725 = vpop.f32.mrf.mxu0
    %v2726 = vadd.f32 %v2617, %v2725
    %v2727 = vpop.f32.mrf.mxu0
    %v2728 = vpop.f32.mrf.mxu0
    %v2729 = vadd.f32 %v2617, %v2728
    %v2730 = vpop.f32.mrf.mxu0
    %2731 = vmatprep.mubr.bf16.mxu0 0
    %2732 = vmatmul.mubr.bf16.gmra.mxu0 %v2592
    %v2733 = vpop.f32.mrf.mxu0
    %v2734 = vadd.f32 %v2617, %v2733
    %v2735 = vpop.f32.mrf.mxu0
    %v2736 = vpop.f32.mrf.mxu0
    %v2737 = vadd.f32 %v2617, %v2736
    %v2738 = vpop.f32.mrf.mxu0
    %2739 = vmatprep.mubr.bf16.mxu0 0
    %2740 = vmatmul.mubr.bf16.gmra.mxu0 %v2593
    %v2741 = vpop.f32.mrf.mxu0
    %v2742 = vadd.f32 %v2617, %v2741
    %v2743 = vpop.f32.mrf.mxu0
    %v2744 = vpop.f32.mrf.mxu0
    %v2745 = vadd.f32 %v2617, %v2744
    %v2746 = vpop.f32.mrf.mxu0
    %2747 = vmatprep.mubr.bf16.mxu0 0
    %2748 = vmatmul.mubr.bf16.gmra.mxu0 %v2594
    %v2749 = vpop.f32.mrf.mxu0
    %v2750 = vadd.f32 %v2617, %v2749
    %v2751 = vpop.f32.mrf.mxu0
    %v2752 = vpop.f32.mrf.mxu0
    %v2753 = vadd.f32 %v2617, %v2752
    %v2754 = vpop.f32.mrf.mxu0
    %2755 = vmatprep.mubr.bf16.mxu0 0
    %2756 = vmatmul.mubr.bf16.gmra.mxu0 %v2595
    %v2757 = vpop.f32.mrf.mxu0
    %v2758 = vadd.f32 %v2617, %v2757
    %v2759 = vpop.f32.mrf.mxu0
    %v2760 = vpop.f32.mrf.mxu0
    %v2761 = vadd.f32 %v2617, %v2760
    %v2762 = vpop.f32.mrf.mxu0
    %2763 = vdwg.mxu0
    %v2764 = vpack.c.bf16 %v2705, %v2702
    %v2765 = vpack.c.bf16 %v2713, %v2710
    %v2766 = vpack.c.bf16 %v2721, %v2718
    %v2767 = vpack.c.bf16 %v2729, %v2726
    %v2768 = vpack.c.bf16 %v2737, %v2734
    %v2769 = vpack.c.bf16 %v2745, %v2742
    %v2770 = vpack.c.bf16 %v2753, %v2750
    %v2771 = vpack.c.bf16 %v2761, %v2758
    %v2780 = vcombine.high %v2764, %v2764
    %v2782 = vunpack.c.l.s4 1966171168
    %v2783 = vunpack.c.0.s8 %v2782
    %v2784 = vlaneseq
    %v2785 = vshrl.u32 %v2784, 7
    %v2786 = vsub.s32 %v2783, %v2785
    %v2787 = vrot.slane %v2764, %v2786
    %v2789 = vunpack.c.l.s4 1966171168
    %v2790 = vunpack.c.0.s8 %v2789
    %v2791 = vlaneseq
    %v2792 = vshrl.u32 %v2791, 7
    %v2793 = vsub.s32 %v2790, %v2792
    %v2794 = vrot.slane %v2780, %v2793
    %v2795 = vcombine.high %v2787, %v2787
    %v2796 = vcombine.high %v2794, %v2794
    %v2798 = vunpack.c.l.s4 1966171168
    %v2799 = vunpack.c.0.s8 %v2798
    %v2800 = vlaneseq
    %v2801 = vshrl.u32 %v2800, 7
    %v2802 = vsub.s32 %v2799, %v2801
    %v2803 = vrot.slane %v2787, %v2802
    %v2805 = vunpack.c.l.s4 1966171168
    %v2806 = vunpack.c.0.s8 %v2805
    %v2807 = vlaneseq
    %v2808 = vshrl.u32 %v2807, 7
    %v2809 = vsub.s32 %v2806, %v2808
    %v2810 = vrot.slane %v2794, %v2809
    %v2812 = vunpack.c.l.s4 1966171168
    %v2813 = vunpack.c.0.s8 %v2812
    %v2814 = vlaneseq
    %v2815 = vshrl.u32 %v2814, 7
    %v2816 = vsub.s32 %v2813, %v2815
    %v2817 = vrot.slane %v2795, %v2816
    %v2819 = vunpack.c.l.s4 1966171168
    %v2820 = vunpack.c.0.s8 %v2819
    %v2821 = vlaneseq
    %v2822 = vshrl.u32 %v2821, 7
    %v2823 = vsub.s32 %v2820, %v2822
    %v2824 = vrot.slane %v2796, %v2823
    %v2825 = vcombine.high %v2803, %v2803
    %v2826 = vcombine.high %v2810, %v2810
    %v2827 = vcombine.high %v2817, %v2817
    %v2828 = vcombine.high %v2824, %v2824
    %v2829 = vcombine.high %v2765, %v2765
    %v2831 = vunpack.c.l.s4 1966171168
    %v2832 = vunpack.c.0.s8 %v2831
    %v2833 = vlaneseq
    %v2834 = vshrl.u32 %v2833, 7
    %v2835 = vsub.s32 %v2832, %v2834
    %v2836 = vrot.slane %v2765, %v2835
    %v2838 = vunpack.c.l.s4 1966171168
    %v2839 = vunpack.c.0.s8 %v2838
    %v2840 = vlaneseq
    %v2841 = vshrl.u32 %v2840, 7
    %v2842 = vsub.s32 %v2839, %v2841
    %v2843 = vrot.slane %v2829, %v2842
    %v2844 = vcombine.high %v2836, %v2836
    %v2845 = vcombine.high %v2843, %v2843
    %v2847 = vunpack.c.l.s4 1966171168
    %v2848 = vunpack.c.0.s8 %v2847
    %v2849 = vlaneseq
    %v2850 = vshrl.u32 %v2849, 7
    %v2851 = vsub.s32 %v2848, %v2850
    %v2852 = vrot.slane %v2836, %v2851
    %v2854 = vunpack.c.l.s4 1966171168
    %v2855 = vunpack.c.0.s8 %v2854
    %v2856 = vlaneseq
    %v2857 = vshrl.u32 %v2856, 7
    %v2858 = vsub.s32 %v2855, %v2857
    %v2859 = vrot.slane %v2843, %v2858
    %v2861 = vunpack.c.l.s4 1966171168
    %v2862 = vunpack.c.0.s8 %v2861
    %v2863 = vlaneseq
    %v2864 = vshrl.u32 %v2863, 7
    %v2865 = vsub.s32 %v2862, %v2864
    %v2866 = vrot.slane %v2844, %v2865
    %v2868 = vunpack.c.l.s4 1966171168
    %v2869 = vunpack.c.0.s8 %v2868
    %v2870 = vlaneseq
    %v2871 = vshrl.u32 %v2870, 7
    %v2872 = vsub.s32 %v2869, %v2871
    %v2873 = vrot.slane %v2845, %v2872
    %v2874 = vcombine.high %v2852, %v2852
    %v2875 = vcombine.high %v2859, %v2859
    %v2876 = vcombine.high %v2866, %v2866
    %v2877 = vcombine.high %v2873, %v2873
    %v2878 = vcombine.high %v2766, %v2766
    %v2880 = vunpack.c.l.s4 1966171168
    %v2881 = vunpack.c.0.s8 %v2880
    %v2882 = vlaneseq
    %v2883 = vshrl.u32 %v2882, 7
    %v2884 = vsub.s32 %v2881, %v2883
    %v2885 = vrot.slane %v2766, %v2884
    %v2887 = vunpack.c.l.s4 1966171168
    %v2888 = vunpack.c.0.s8 %v2887
    %v2889 = vlaneseq
    %v2890 = vshrl.u32 %v2889, 7
    %v2891 = vsub.s32 %v2888, %v2890
    %v2892 = vrot.slane %v2878, %v2891
    %v2893 = vcombine.high %v2885, %v2885
    %v2894 = vcombine.high %v2892, %v2892
    %v2896 = vunpack.c.l.s4 1966171168
    %v2897 = vunpack.c.0.s8 %v2896
    %v2898 = vlaneseq
    %v2899 = vshrl.u32 %v2898, 7
    %v2900 = vsub.s32 %v2897, %v2899
    %v2901 = vrot.slane %v2885, %v2900
    %v2903 = vunpack.c.l.s4 1966171168
    %v2904 = vunpack.c.0.s8 %v2903
    %v2905 = vlaneseq
    %v2906 = vshrl.u32 %v2905, 7
    %v2907 = vsub.s32 %v2904, %v2906
    %v2908 = vrot.slane %v2892, %v2907
    %v2910 = vunpack.c.l.s4 1966171168
    %v2911 = vunpack.c.0.s8 %v2910
    %v2912 = vlaneseq
    %v2913 = vshrl.u32 %v2912, 7
    %v2914 = vsub.s32 %v2911, %v2913
    %v2915 = vrot.slane %v2893, %v2914
    %v2917 = vunpack.c.l.s4 1966171168
    %v2918 = vunpack.c.0.s8 %v2917
    %v2919 = vlaneseq
    %v2920 = vshrl.u32 %v2919, 7
    %v2921 = vsub.s32 %v2918, %v2920
    %v2922 = vrot.slane %v2894, %v2921
    %v2923 = vcombine.high %v2901, %v2901
    %v2924 = vcombine.high %v2908, %v2908
    %v2925 = vcombine.high %v2915, %v2915
    %v2926 = vcombine.high %v2922, %v2922
    %v2927 = vcombine.high %v2767, %v2767
    %v2929 = vunpack.c.l.s4 1966171168
    %v2930 = vunpack.c.0.s8 %v2929
    %v2931 = vlaneseq
    %v2932 = vshrl.u32 %v2931, 7
    %v2933 = vsub.s32 %v2930, %v2932
    %v2934 = vrot.slane %v2767, %v2933
    %v2936 = vunpack.c.l.s4 1966171168
    %v2937 = vunpack.c.0.s8 %v2936
    %v2938 = vlaneseq
    %v2939 = vshrl.u32 %v2938, 7
    %v2940 = vsub.s32 %v2937, %v2939
    %v2941 = vrot.slane %v2927, %v2940
    %v2942 = vcombine.high %v2934, %v2934
    %v2943 = vcombine.high %v2941, %v2941
    %v2945 = vunpack.c.l.s4 1966171168
    %v2946 = vunpack.c.0.s8 %v2945
    %v2947 = vlaneseq
    %v2948 = vshrl.u32 %v2947, 7
    %v2949 = vsub.s32 %v2946, %v2948
    %v2950 = vrot.slane %v2934, %v2949
    %v2952 = vunpack.c.l.s4 1966171168
    %v2953 = vunpack.c.0.s8 %v2952
    %v2954 = vlaneseq
    %v2955 = vshrl.u32 %v2954, 7
    %v2956 = vsub.s32 %v2953, %v2955
    %v2957 = vrot.slane %v2941, %v2956
    %v2959 = vunpack.c.l.s4 1966171168
    %v2960 = vunpack.c.0.s8 %v2959
    %v2961 = vlaneseq
    %v2962 = vshrl.u32 %v2961, 7
    %v2963 = vsub.s32 %v2960, %v2962
    %v2964 = vrot.slane %v2942, %v2963
    %v2966 = vunpack.c.l.s4 1966171168
    %v2967 = vunpack.c.0.s8 %v2966
    %v2968 = vlaneseq
    %v2969 = vshrl.u32 %v2968, 7
    %v2970 = vsub.s32 %v2967, %v2969
    %v2971 = vrot.slane %v2943, %v2970
    %v2972 = vcombine.high %v2950, %v2950
    %v2973 = vcombine.high %v2957, %v2957
    %v2974 = vcombine.high %v2964, %v2964
    %v2975 = vcombine.high %v2971, %v2971
    %v2976 = vcombine.high %v2768, %v2768
    %v2978 = vunpack.c.l.s4 1966171168
    %v2979 = vunpack.c.0.s8 %v2978
    %v2980 = vlaneseq
    %v2981 = vshrl.u32 %v2980, 7
    %v2982 = vsub.s32 %v2979, %v2981
    %v2983 = vrot.slane %v2768, %v2982
    %v2985 = vunpack.c.l.s4 1966171168
    %v2986 = vunpack.c.0.s8 %v2985
    %v2987 = vlaneseq
    %v2988 = vshrl.u32 %v2987, 7
    %v2989 = vsub.s32 %v2986, %v2988
    %v2990 = vrot.slane %v2976, %v2989
    %v2991 = vcombine.high %v2983, %v2983
    %v2992 = vcombine.high %v2990, %v2990
    %v2994 = vunpack.c.l.s4 1966171168
    %v2995 = vunpack.c.0.s8 %v2994
    %v2996 = vlaneseq
    %v2997 = vshrl.u32 %v2996, 7
    %v2998 = vsub.s32 %v2995, %v2997
    %v2999 = vrot.slane %v2983, %v2998
    %v3001 = vunpack.c.l.s4 1966171168
    %v3002 = vunpack.c.0.s8 %v3001
    %v3003 = vlaneseq
    %v3004 = vshrl.u32 %v3003, 7
    %v3005 = vsub.s32 %v3002, %v3004
    %v3006 = vrot.slane %v2990, %v3005
    %v3008 = vunpack.c.l.s4 1966171168
    %v3009 = vunpack.c.0.s8 %v3008
    %v3010 = vlaneseq
    %v3011 = vshrl.u32 %v3010, 7
    %v3012 = vsub.s32 %v3009, %v3011
    %v3013 = vrot.slane %v2991, %v3012
    %v3015 = vunpack.c.l.s4 1966171168
    %v3016 = vunpack.c.0.s8 %v3015
    %v3017 = vlaneseq
    %v3018 = vshrl.u32 %v3017, 7
    %v3019 = vsub.s32 %v3016, %v3018
    %v3020 = vrot.slane %v2992, %v3019
    %v3021 = vcombine.high %v2999, %v2999
    %v3022 = vcombine.high %v3006, %v3006
    %v3023 = vcombine.high %v3013, %v3013
    %v3024 = vcombine.high %v3020, %v3020
    %v3025 = vcombine.high %v2769, %v2769
    %v3027 = vunpack.c.l.s4 1966171168
    %v3028 = vunpack.c.0.s8 %v3027
    %v3029 = vlaneseq
    %v3030 = vshrl.u32 %v3029, 7
    %v3031 = vsub.s32 %v3028, %v3030
    %v3032 = vrot.slane %v2769, %v3031
    %v3034 = vunpack.c.l.s4 1966171168
    %v3035 = vunpack.c.0.s8 %v3034
    %v3036 = vlaneseq
    %v3037 = vshrl.u32 %v3036, 7
    %v3038 = vsub.s32 %v3035, %v3037
    %v3039 = vrot.slane %v3025, %v3038
    %v3040 = vcombine.high %v3032, %v3032
    %v3041 = vcombine.high %v3039, %v3039
    %v3043 = vunpack.c.l.s4 1966171168
    %v3044 = vunpack.c.0.s8 %v3043
    %v3045 = vlaneseq
    %v3046 = vshrl.u32 %v3045, 7
    %v3047 = vsub.s32 %v3044, %v3046
    %v3048 = vrot.slane %v3032, %v3047
    %v3050 = vunpack.c.l.s4 1966171168
    %v3051 = vunpack.c.0.s8 %v3050
    %v3052 = vlaneseq
    %v3053 = vshrl.u32 %v3052, 7
    %v3054 = vsub.s32 %v3051, %v3053
    %v3055 = vrot.slane %v3039, %v3054
    %v3057 = vunpack.c.l.s4 1966171168
    %v3058 = vunpack.c.0.s8 %v3057
    %v3059 = vlaneseq
    %v3060 = vshrl.u32 %v3059, 7
    %v3061 = vsub.s32 %v3058, %v3060
    %v3062 = vrot.slane %v3040, %v3061
    %v3064 = vunpack.c.l.s4 1966171168
    %v3065 = vunpack.c.0.s8 %v3064
    %v3066 = vlaneseq
    %v3067 = vshrl.u32 %v3066, 7
    %v3068 = vsub.s32 %v3065, %v3067
    %v3069 = vrot.slane %v3041, %v3068
    %v3070 = vcombine.high %v3048, %v3048
    %v3071 = vcombine.high %v3055, %v3055
    %v3072 = vcombine.high %v3062, %v3062
    %v3073 = vcombine.high %v3069, %v3069
    %v3074 = vcombine.high %v2770, %v2770
    %v3076 = vunpack.c.l.s4 1966171168
    %v3077 = vunpack.c.0.s8 %v3076
    %v3078 = vlaneseq
    %v3079 = vshrl.u32 %v3078, 7
    %v3080 = vsub.s32 %v3077, %v3079
    %v3081 = vrot.slane %v2770, %v3080
    %v3083 = vunpack.c.l.s4 1966171168
    %v3084 = vunpack.c.0.s8 %v3083
    %v3085 = vlaneseq
    %v3086 = vshrl.u32 %v3085, 7
    %v3087 = vsub.s32 %v3084, %v3086
    %v3088 = vrot.slane %v3074, %v3087
    %v3089 = vcombine.high %v3081, %v3081
    %v3090 = vcombine.high %v3088, %v3088
    %v3092 = vunpack.c.l.s4 1966171168
    %v3093 = vunpack.c.0.s8 %v3092
    %v3094 = vlaneseq
    %v3095 = vshrl.u32 %v3094, 7
    %v3096 = vsub.s32 %v3093, %v3095
    %v3097 = vrot.slane %v3081, %v3096
    %v3099 = vunpack.c.l.s4 1966171168
    %v3100 = vunpack.c.0.s8 %v3099
    %v3101 = vlaneseq
    %v3102 = vshrl.u32 %v3101, 7
    %v3103 = vsub.s32 %v3100, %v3102
    %v3104 = vrot.slane %v3088, %v3103
    %v3106 = vunpack.c.l.s4 1966171168
    %v3107 = vunpack.c.0.s8 %v3106
    %v3108 = vlaneseq
    %v3109 = vshrl.u32 %v3108, 7
    %v3110 = vsub.s32 %v3107, %v3109
    %v3111 = vrot.slane %v3089, %v3110
    %v3113 = vunpack.c.l.s4 1966171168
    %v3114 = vunpack.c.0.s8 %v3113
    %v3115 = vlaneseq
    %v3116 = vshrl.u32 %v3115, 7
    %v3117 = vsub.s32 %v3114, %v3116
    %v3118 = vrot.slane %v3090, %v3117
    %v3119 = vcombine.high %v3097, %v3097
    %v3120 = vcombine.high %v3104, %v3104
    %v3121 = vcombine.high %v3111, %v3111
    %v3122 = vcombine.high %v3118, %v3118
    %v3123 = vcombine.high %v2771, %v2771
    %v3125 = vunpack.c.l.s4 1966171168
    %v3126 = vunpack.c.0.s8 %v3125
    %v3127 = vlaneseq
    %v3128 = vshrl.u32 %v3127, 7
    %v3129 = vsub.s32 %v3126, %v3128
    %v3130 = vrot.slane %v2771, %v3129
    %v3132 = vunpack.c.l.s4 1966171168
    %v3133 = vunpack.c.0.s8 %v3132
    %v3134 = vlaneseq
    %v3135 = vshrl.u32 %v3134, 7
    %v3136 = vsub.s32 %v3133, %v3135
    %v3137 = vrot.slane %v3123, %v3136
    %v3138 = vcombine.high %v3130, %v3130
    %v3139 = vcombine.high %v3137, %v3137
    %v3141 = vunpack.c.l.s4 1966171168
    %v3142 = vunpack.c.0.s8 %v3141
    %v3143 = vlaneseq
    %v3144 = vshrl.u32 %v3143, 7
    %v3145 = vsub.s32 %v3142, %v3144
    %v3146 = vrot.slane %v3130, %v3145
    %v3148 = vunpack.c.l.s4 1966171168
    %v3149 = vunpack.c.0.s8 %v3148
    %v3150 = vlaneseq
    %v3151 = vshrl.u32 %v3150, 7
    %v3152 = vsub.s32 %v3149, %v3151
    %v3153 = vrot.slane %v3137, %v3152
    %v3155 = vunpack.c.l.s4 1966171168
    %v3156 = vunpack.c.0.s8 %v3155
    %v3157 = vlaneseq
    %v3158 = vshrl.u32 %v3157, 7
    %v3159 = vsub.s32 %v3156, %v3158
    %v3160 = vrot.slane %v3138, %v3159
    %v3162 = vunpack.c.l.s4 1966171168
    %v3163 = vunpack.c.0.s8 %v3162
    %v3164 = vlaneseq
    %v3165 = vshrl.u32 %v3164, 7
    %v3166 = vsub.s32 %v3163, %v3165
    %v3167 = vrot.slane %v3139, %v3166
    %v3168 = vcombine.high %v3146, %v3146
    %v3169 = vcombine.high %v3153, %v3153
    %v3170 = vcombine.high %v3160, %v3160
    %v3171 = vcombine.high %v3167, %v3167
    %3236 = vst [vmem:[#allocation9] sm:$0x1] %v2803
    %3237 = vst [vmem:[#allocation9 + $0x1] sm:$0x1] %v2817
    %3238 = vst [vmem:[#allocation9 + $0x2] sm:$0x1] %v2825
    %3239 = vst [vmem:[#allocation9 + $0x3] sm:$0x1] %v2827
    %3240 = vst [vmem:[#allocation9 + $0x4] sm:$0x1] %v2810
    %3241 = vst [vmem:[#allocation9 + $0x5] sm:$0x1] %v2824
    %3242 = vst [vmem:[#allocation9 + $0x6] sm:$0x1] %v2826
    %3243 = vst [vmem:[#allocation9 + $0x7] sm:$0x1] %v2828
    %3244 = vst [vmem:[#allocation9 + $0x8] sm:$0x1] %v2852
    %3245 = vst [vmem:[#allocation9 + $0x9] sm:$0x1] %v2866
    %3246 = vst [vmem:[#allocation9 + $0xa] sm:$0x1] %v2874
    %3247 = vst [vmem:[#allocation9 + $0xb] sm:$0x1] %v2876
    %3248 = vst [vmem:[#allocation9 + $0xc] sm:$0x1] %v2859
    %3249 = vst [vmem:[#allocation9 + $0xd] sm:$0x1] %v2873
    %3250 = vst [vmem:[#allocation9 + $0xe] sm:$0x1] %v2875
    %3251 = vst [vmem:[#allocation9 + $0xf] sm:$0x1] %v2877
    %3252 = vst [vmem:[#allocation9 + $0x10] sm:$0x1] %v2901
    %3253 = vst [vmem:[#allocation9 + $0x11] sm:$0x1] %v2915
    %3254 = vst [vmem:[#allocation9 + $0x12] sm:$0x1] %v2923
    %3255 = vst [vmem:[#allocation9 + $0x13] sm:$0x1] %v2925
    %3256 = vst [vmem:[#allocation9 + $0x14] sm:$0x1] %v2908
    %3257 = vst [vmem:[#allocation9 + $0x15] sm:$0x1] %v2922
    %3258 = vst [vmem:[#allocation9 + $0x16] sm:$0x1] %v2924
    %3259 = vst [vmem:[#allocation9 + $0x17] sm:$0x1] %v2926
    %3260 = vst [vmem:[#allocation9 + $0x18] sm:$0x1] %v2950
    %3261 = vst [vmem:[#allocation9 + $0x19] sm:$0x1] %v2964
    %3262 = vst [vmem:[#allocation9 + $0x1a] sm:$0x1] %v2972
    %3263 = vst [vmem:[#allocation9 + $0x1b] sm:$0x1] %v2974
    %3264 = vst [vmem:[#allocation9 + $0x1c] sm:$0x1] %v2957
    %3265 = vst [vmem:[#allocation9 + $0x1d] sm:$0x1] %v2971
    %3266 = vst [vmem:[#allocation9 + $0x1e] sm:$0x1] %v2973
    %3267 = vst [vmem:[#allocation9 + $0x1f] sm:$0x1] %v2975
    %3268 = vst [vmem:[#allocation9 + $0x20] sm:$0x1] %v2999
    %3269 = vst [vmem:[#allocation9 + $0x21] sm:$0x1] %v3013
    %3270 = vst [vmem:[#allocation9 + $0x22] sm:$0x1] %v3021
    %3271 = vst [vmem:[#allocation9 + $0x23] sm:$0x1] %v3023
    %3272 = vst [vmem:[#allocation9 + $0x24] sm:$0x1] %v3006
    %3273 = vst [vmem:[#allocation9 + $0x25] sm:$0x1] %v3020
    %3274 = vst [vmem:[#allocation9 + $0x26] sm:$0x1] %v3022
    %3275 = vst [vmem:[#allocation9 + $0x27] sm:$0x1] %v3024
    %3276 = vst [vmem:[#allocation9 + $0x28] sm:$0x1] %v3048
    %3277 = vst [vmem:[#allocation9 + $0x29] sm:$0x1] %v3062
    %3278 = vst [vmem:[#allocation9 + $0x2a] sm:$0x1] %v3070
    %3279 = vst [vmem:[#allocation9 + $0x2b] sm:$0x1] %v3072
    %3280 = vst [vmem:[#allocation9 + $0x2c] sm:$0x1] %v3055
    %3281 = vst [vmem:[#allocation9 + $0x2d] sm:$0x1] %v3069
    %3282 = vst [vmem:[#allocation9 + $0x2e] sm:$0x1] %v3071
    %3283 = vst [vmem:[#allocation9 + $0x2f] sm:$0x1] %v3073
    %3284 = vst [vmem:[#allocation9 + $0x30] sm:$0x1] %v3097
    %3285 = vst [vmem:[#allocation9 + $0x31] sm:$0x1] %v3111
    %3286 = vst [vmem:[#allocation9 + $0x32] sm:$0x1] %v3119
    %3287 = vst [vmem:[#allocation9 + $0x33] sm:$0x1] %v3121
    %3288 = vst [vmem:[#allocation9 + $0x34] sm:$0x1] %v3104
    %3289 = vst [vmem:[#allocation9 + $0x35] sm:$0x1] %v3118
    %3290 = vst [vmem:[#allocation9 + $0x36] sm:$0x1] %v3120
    %3291 = vst [vmem:[#allocation9 + $0x37] sm:$0x1] %v3122
    %3292 = vst [vmem:[#allocation9 + $0x38] sm:$0x1] %v3146
    %3293 = vst [vmem:[#allocation9 + $0x39] sm:$0x1] %v3160
    %3294 = vst [vmem:[#allocation9 + $0x3a] sm:$0x1] %v3168
    %3295 = vst [vmem:[#allocation9 + $0x3b] sm:$0x1] %v3170
    %3296 = vst [vmem:[#allocation9 + $0x3c] sm:$0x1] %v3153
    %3297 = vst [vmem:[#allocation9 + $0x3d] sm:$0x1] %v3167
    %3298 = vst [vmem:[#allocation9 + $0x3e] sm:$0x1] %v3169
    %3299 = vst [vmem:[#allocation9 + $0x3f] sm:$0x1] %v3171
    %3300 = vmax.xlane.f32.xlu0 %v2702
    %v3301 = vpop.xlane.xlu0 %3300
    %3302 = vmax.xlane.f32.xlu0 %v2705
    %v3303 = vpop.xlane.xlu0 %3302
    %3304 = vmax.xlane.f32.xlu0 %v2710
    %v3305 = vpop.xlane.xlu0 %3304
    %3306 = vmax.xlane.f32.xlu0 %v2713
    %v3307 = vpop.xlane.xlu0 %3306
    %3308 = vmax.xlane.f32.xlu0 %v2718
    %v3309 = vpop.xlane.xlu0 %3308
    %3310 = vmax.xlane.f32.xlu0 %v2721
    %v3311 = vpop.xlane.xlu0 %3310
    %3312 = vmax.xlane.f32.xlu0 %v2726
    %v3313 = vpop.xlane.xlu0 %3312
    %3314 = vmax.xlane.f32.xlu0 %v2729
    %v3315 = vpop.xlane.xlu0 %3314
    %3316 = vmax.xlane.f32.xlu0 %v2734
    %v3317 = vpop.xlane.xlu0 %3316
    %3318 = vmax.xlane.f32.xlu0 %v2737
    %v3319 = vpop.xlane.xlu0 %3318
    %3320 = vmax.xlane.f32.xlu0 %v2742
    %v3321 = vpop.xlane.xlu0 %3320
    %3322 = vmax.xlane.f32.xlu0 %v2745
    %v3323 = vpop.xlane.xlu0 %3322
    %3324 = vmax.xlane.f32.xlu0 %v2750
    %v3325 = vpop.xlane.xlu0 %3324
    %3326 = vmax.xlane.f32.xlu0 %v2753
    %v3327 = vpop.xlane.xlu0 %3326
    %3328 = vmax.xlane.f32.xlu0 %v2758
    %v3329 = vpop.xlane.xlu0 %3328
    %3330 = vmax.xlane.f32.xlu0 %v2761
    %v3331 = vpop.xlane.xlu0 %3330
    %v3332 = vsub.f32 %v2702, %v3301
    %v3333 = vsub.f32 %v2705, %v3303
    %v3334 = vsub.f32 %v2710, %v3305
    %v3335 = vsub.f32 %v2713, %v3307
    %v3336 = vsub.f32 %v2718, %v3309
    %v3337 = vsub.f32 %v2721, %v3311
    %v3338 = vsub.f32 %v2726, %v3313
    %v3339 = vsub.f32 %v2729, %v3315
    %v3340 = vsub.f32 %v2734, %v3317
    %v3341 = vsub.f32 %v2737, %v3319
    %v3342 = vsub.f32 %v2742, %v3321
    %v3343 = vsub.f32 %v2745, %v3323
    %v3344 = vsub.f32 %v2750, %v3325
    %v3345 = vsub.f32 %v2753, %v3327
    %v3346 = vsub.f32 %v2758, %v3329
    %v3347 = vsub.f32 %v2761, %v3331
    %v3348 = vmul.f32 %v3332, 1.442695
    %v3349 = vpow.pop %v3348
    %v3350 = vmul.f32 %v3333, 1.442695
    %v3351 = vpow.pop %v3350
    %v3352 = vmul.f32 %v3334, 1.442695
    %v3353 = vpow.pop %v3352
    %v3354 = vmul.f32 %v3335, 1.442695
    %v3355 = vpow.pop %v3354
    %v3356 = vmul.f32 %v3336, 1.442695
    %v3357 = vpow.pop %v3356
    %v3358 = vmul.f32 %v3337, 1.442695
    %v3359 = vpow.pop %v3358
    %v3360 = vmul.f32 %v3338, 1.442695
    %v3361 = vpow.pop %v3360
    %v3362 = vmul.f32 %v3339, 1.442695
    %v3363 = vpow.pop %v3362
    %v3364 = vmul.f32 %v3340, 1.442695
    %v3365 = vpow.pop %v3364
    %v3366 = vmul.f32 %v3341, 1.442695
    %v3367 = vpow.pop %v3366
    %v3368 = vmul.f32 %v3342, 1.442695
    %v3369 = vpow.pop %v3368
    %v3370 = vmul.f32 %v3343, 1.442695
    %v3371 = vpow.pop %v3370
    %v3372 = vmul.f32 %v3344, 1.442695
    %v3373 = vpow.pop %v3372
    %v3374 = vmul.f32 %v3345, 1.442695
    %v3375 = vpow.pop %v3374
    %v3376 = vmul.f32 %v3346, 1.442695
    %v3377 = vpow.pop %v3376
    %v3378 = vmul.f32 %v3347, 1.442695
    %v3379 = vpow.pop %v3378
    %3380 = vadd.xlane.f32.xlu0 %v3349
    %v3381 = vpop.xlane.xlu0 %3380
    %3382 = vadd.xlane.f32.xlu0 %v3351
    %v3383 = vpop.xlane.xlu0 %3382
    %3384 = vadd.xlane.f32.xlu0 %v3353
    %v3385 = vpop.xlane.xlu0 %3384
    %3386 = vadd.xlane.f32.xlu0 %v3355
    %v3387 = vpop.xlane.xlu0 %3386
    %3388 = vadd.xlane.f32.xlu0 %v3357
    %v3389 = vpop.xlane.xlu0 %3388
    %3390 = vadd.xlane.f32.xlu0 %v3359
    %v3391 = vpop.xlane.xlu0 %3390
    %3392 = vadd.xlane.f32.xlu0 %v3361
    %v3393 = vpop.xlane.xlu0 %3392
    %3394 = vadd.xlane.f32.xlu0 %v3363
    %v3395 = vpop.xlane.xlu0 %3394
    %3396 = vadd.xlane.f32.xlu0 %v3365
    %v3397 = vpop.xlane.xlu0 %3396
    %3398 = vadd.xlane.f32.xlu0 %v3367
    %v3399 = vpop.xlane.xlu0 %3398
    %3400 = vadd.xlane.f32.xlu0 %v3369
    %v3401 = vpop.xlane.xlu0 %3400
    %3402 = vadd.xlane.f32.xlu0 %v3371
    %v3403 = vpop.xlane.xlu0 %3402
    %3404 = vadd.xlane.f32.xlu0 %v3373
    %v3405 = vpop.xlane.xlu0 %3404
    %3406 = vadd.xlane.f32.xlu0 %v3375
    %v3407 = vpop.xlane.xlu0 %3406
    %3408 = vadd.xlane.f32.xlu0 %v3377
    %v3409 = vpop.xlane.xlu0 %3408
    %3410 = vadd.xlane.f32.xlu0 %v3379
    %v3411 = vpop.xlane.xlu0 %3410
    %v3412 = vlog2.pop %v3381
    %v3413 = vmul.f32 %v3412, 0.6931472
    %v3414 = vlog2.pop %v3383
    %v3415 = vmul.f32 %v3414, 0.6931472
    %v3416 = vlog2.pop %v3385
    %v3417 = vmul.f32 %v3416, 0.6931472
    %v3418 = vlog2.pop %v3387
    %v3419 = vmul.f32 %v3418, 0.6931472
    %v3420 = vlog2.pop %v3389
    %v3421 = vmul.f32 %v3420, 0.6931472
    %v3422 = vlog2.pop %v3391
    %v3423 = vmul.f32 %v3422, 0.6931472
    %v3424 = vlog2.pop %v3393
    %v3425 = vmul.f32 %v3424, 0.6931472
    %v3426 = vlog2.pop %v3395
    %v3427 = vmul.f32 %v3426, 0.6931472
    %v3428 = vlog2.pop %v3397
    %v3429 = vmul.f32 %v3428, 0.6931472
    %v3430 = vlog2.pop %v3399
    %v3431 = vmul.f32 %v3430, 0.6931472
    %v3432 = vlog2.pop %v3401
    %v3433 = vmul.f32 %v3432, 0.6931472
    %v3434 = vlog2.pop %v3403
    %v3435 = vmul.f32 %v3434, 0.6931472
    %v3436 = vlog2.pop %v3405
    %v3437 = vmul.f32 %v3436, 0.6931472
    %v3438 = vlog2.pop %v3407
    %v3439 = vmul.f32 %v3438, 0.6931472
    %v3440 = vlog2.pop %v3409
    %v3441 = vmul.f32 %v3440, 0.6931472
    %v3442 = vlog2.pop %v3411
    %v3443 = vmul.f32 %v3442, 0.6931472
    %v3444 = vadd.f32 %v3301, %v3413
    %v3445 = vadd.f32 %v3303, %v3415
    %v3446 = vadd.f32 %v3305, %v3417
    %v3447 = vadd.f32 %v3307, %v3419
    %v3448 = vadd.f32 %v3309, %v3421
    %v3449 = vadd.f32 %v3311, %v3423
    %v3450 = vadd.f32 %v3313, %v3425
    %v3451 = vadd.f32 %v3315, %v3427
    %v3452 = vadd.f32 %v3317, %v3429
    %v3453 = vadd.f32 %v3319, %v3431
    %v3454 = vadd.f32 %v3321, %v3433
    %v3455 = vadd.f32 %v3323, %v3435
    %v3456 = vadd.f32 %v3325, %v3437
    %v3457 = vadd.f32 %v3327, %v3439
    %v3458 = vadd.f32 %v3329, %v3441
    %v3459 = vadd.f32 %v3331, %v3443
    %vm3460 = vcmask 7168
    %3461 = vst.msk [vmem:[#allocation8] sm:$0xff] %vm3460, %v3444
    %3462 = vst.msk [vmem:[#allocation8 + $0x8] sm:$0xff] %vm3460, %v3445
    %3463 = vst.msk [vmem:[#allocation8 + $0x10] sm:$0xff] %vm3460, %v3446
    %3464 = vst.msk [vmem:[#allocation8 + $0x18] sm:$0xff] %vm3460, %v3447
    %3465 = vst.msk [vmem:[#allocation8 + $0x20] sm:$0xff] %vm3460, %v3448
    %3466 = vst.msk [vmem:[#allocation8 + $0x28] sm:$0xff] %vm3460, %v3449
    %3467 = vst.msk [vmem:[#allocation8 + $0x30] sm:$0xff] %vm3460, %v3450
    %3468 = vst.msk [vmem:[#allocation8 + $0x38] sm:$0xff] %vm3460, %v3451
    %3469 = vst.msk [vmem:[#allocation8 + $0x40] sm:$0xff] %vm3460, %v3452
    %3470 = vst.msk [vmem:[#allocation8 + $0x48] sm:$0xff] %vm3460, %v3453
    %3471 = vst.msk [vmem:[#allocation8 + $0x50] sm:$0xff] %vm3460, %v3454
    %3472 = vst.msk [vmem:[#allocation8 + $0x58] sm:$0xff] %vm3460, %v3455
    %3473 = vst.msk [vmem:[#allocation8 + $0x60] sm:$0xff] %vm3460, %v3456
    %3474 = vst.msk [vmem:[#allocation8 + $0x68] sm:$0xff] %vm3460, %v3457
    %3475 = vst.msk [vmem:[#allocation8 + $0x70] sm:$0xff] %vm3460, %v3458
    %3476 = vst.msk [vmem:[#allocation8 + $0x78] sm:$0xff] %vm3460, %v3459
    // Predicated region
    $region34: #{tpu_custom_call.1} parent=1 // pred_check
      _
    $region35: #{tpu_custom_call.1} parent=1 // pred_check_branch
      %3478 = sbr.rel (0) target = $region37
    $region36: #{tpu_custom_call.1} parent=1 // pred_region
      // Predicated region
      $region38: #{tpu_custom_call.1} parent=36 // pred_check
        _
      $region39: #{tpu_custom_call.1} parent=36 // pred_check_branch
        %3480 = sbr.rel (0) target = $region41
      $region40: #{tpu_custom_call.1} parent=36 // pred_region
        // Predicated region
        $region42: #{tpu_custom_call.1} parent=40 // pred_check
          _
        $region43: #{tpu_custom_call.1} parent=40 // pred_check_branch
          %3482 = sbr.rel target = $region45
        $region44: #{tpu_custom_call.1} parent=40 // pred_region
          // Predicated region
          $region57: #{tpu_custom_call.1} parent=44 // pred_check
            _
          $region58: #{tpu_custom_call.1} parent=44 // pred_check_branch
            %3498 = sbr.rel (0) target = $region60
          $region59: #{tpu_custom_call.1} parent=44 // pred_region
            %s3500 = ssub.s32 4, 1
            loop: start=0, step=1, limit=1
            $region61: #{tpu_custom_call.1} parent=59 // loop_pre_header
              _
            $region62: #{tpu_custom_call.1} parent=59 // loop_header
              %s3502 = sphi 0, %s3506
              %p3503 = scmp.ge.s32.totalorder %s3502, 1
              %s3507 = sphi [#allocation8], [#allocation8]
              %s3508 = sphi %s5, %s5
            $region63: #{tpu_custom_call.1} parent=59 // loop_header_branch
              %3505 = sbr.rel (%p3503) target = $region67
            $region64: #{tpu_custom_call.1} parent=59 // loop_body
              %v3509 = vld [vmem:[%s3507] sm:%s3500]
              %3510 = vst [vmem:[%s3508] sm:%s3500] %v3509
            $region65: #{tpu_custom_call.1} parent=59 // loop_footer
              %s3506 = sadd.s32 1, %s3502
            $region66: #{tpu_custom_call.1} parent=59 // loop_footer_branch
              %3501 = sbr.rel target = $region62
            $region67: #{tpu_custom_call.1} parent=59 // loop_exit
              _
          $region60: #{tpu_custom_call.1} parent=44 // pred_fallthru
            _
        $region45: #{tpu_custom_call.1} parent=40 // pred_fallthru
          _
        // Predicated region
        $region46: #{tpu_custom_call.1} parent=40 // pred_check
          _
        $region47: #{tpu_custom_call.1} parent=40 // pred_check_branch
          %3484 = sbr.rel (0) target = $region49
        $region48: #{tpu_custom_call.1} parent=40 // pred_region
          %s3486 = ssub.s32 4, 1
          loop: start=0, step=1, limit=1
          $region50: #{tpu_custom_call.1} parent=48 // loop_pre_header
            _
          $region51: #{tpu_custom_call.1} parent=48 // loop_header
            %s3488 = sphi 0, %s3492
            %p3489 = scmp.ge.s32.totalorder %s3488, 1
            %s3493 = sphi [#allocation8], [#allocation8]
            %s3494 = sphi %s5, %s5
          $region52: #{tpu_custom_call.1} parent=48 // loop_header_branch
            %3491 = sbr.rel (%p3489) target = $region56
          $region53: #{tpu_custom_call.1} parent=48 // loop_body
            %v3495 = vld [vmem:[%s3493] sm:%s3486]
            %3496 = vst [vmem:[%s3494] sm:%s3486] %v3495
          $region54: #{tpu_custom_call.1} parent=48 // loop_footer
            %s3492 = sadd.s32 1, %s3488
          $region55: #{tpu_custom_call.1} parent=48 // loop_footer_branch
            %3487 = sbr.rel target = $region51
          $region56: #{tpu_custom_call.1} parent=48 // loop_exit
            _
        $region49: #{tpu_custom_call.1} parent=40 // pred_fallthru
          _
      $region41: #{tpu_custom_call.1} parent=36 // pred_fallthru
        _
      %3511 = vnop
    $region37: #{tpu_custom_call.1} parent=1 // pred_fallthru
      _
    // Predicated region
    $region68: #{tpu_custom_call.1} parent=1 // pred_check
      _
    $region69: #{tpu_custom_call.1} parent=1 // pred_check_branch
      %3513 = sbr.rel (0) target = $region71
    $region70: #{tpu_custom_call.1} parent=1 // pred_region
      %s3515 = ssub.s32 1024, 16
      %3516 = vsyncadd [#allocation4], %s3515
      %s3517 = sshll.u32 [#allocation9], 4
      %s3518 = int_to_ptr.vmem [resolvable:$true] %s3517
      %3523 = dma.vmem_to_hbm [thread:$0]  %s3518, 16, %s6, [#allocation4], 16, 16, 1
    $region71: #{tpu_custom_call.1} parent=1 // pred_fallthru
      _
    // Predicated region
    $region72: #{tpu_custom_call.1} parent=1 // pred_check
      _
    $region73: #{tpu_custom_call.1} parent=1 // pred_check_branch
      %3525 = sbr.rel (0) target = $region75
    $region74: #{tpu_custom_call.1} parent=1 // pred_region
      _
    $region75: #{tpu_custom_call.1} parent=1 // pred_fallthru
      _
    // Predicated region
    $region76: #{tpu_custom_call.1} parent=1 // pred_check
      _
    $region77: #{tpu_custom_call.1} parent=1 // pred_check_branch
      %3527 = sbr.rel (0) target = $region79
    $region78: #{tpu_custom_call.1} parent=1 // pred_region
      %3528 = dma.done [#allocation4], 1024
    $region79: #{tpu_custom_call.1} parent=1 // pred_fallthru
      _
    %3529 = vsyncpa [#allocation3], 1
    %3530 = vsyncpa [#allocation6], 1
    %3531 = vsyncpa [#allocation4], 1

</llo_original>
